<compile_context>
chip_gen: v6e
topology: v6e:2x2x1
jax: 0.10.0
libtpu: 0.0.40
codegen_flags: <defaults>
</compile_context>

<pallas_src>
import jax
import jax.numpy as jnp
from jax import lax
from jax.experimental import pallas as pl
from jax.experimental.pallas import tpu as pltpu


# ---------------------------------------------------------------------------
# Static network configuration (from the PyTorch module)
# ---------------------------------------------------------------------------
LATENT_DIM = 128
# (Cout, Cin, K, stride, padding, dilation)
CONV_CFG = (
    (32, 1, 64, 8, 63, 1),
    (64, 32, 32, 4, 62, 2),
    (128, 64, 16, 2, 60, 4),
)


def _out_len(l_in, k, stride, pad, dil):
    return (l_in + 2 * pad - dil * (k - 1) - 1) // stride + 1


def _round_up(x, m):
    return (x + m - 1) // m * m


def _mish(x):
    # Mish(x) = x * tanh(softplus(x)); softplus kept numerically safe.
    return x * jnp.tanh(jax.nn.softplus(x))


# ---------------------------------------------------------------------------
# Parameter setup (PyTorch-shaped params; BN folded at call time)
# ---------------------------------------------------------------------------
def _bn_affine(key, c, eps=1e-5):
    """Deterministic inference-mode BatchNorm folded into (scale, shift)."""
    k1, k2, k3, k4 = jax.random.split(key, 4)
    gamma = 1.0 + 0.1 * jax.random.normal(k1, (c,), jnp.float32)
    beta = 0.1 * jax.random.normal(k2, (c,), jnp.float32)
    running_mean = 0.1 * jax.random.normal(k3, (c,), jnp.float32)
    running_var = jax.random.uniform(k4, (c,), jnp.float32, 0.5, 1.5)
    scale = gamma / jnp.sqrt(running_var + eps)
    shift = beta - running_mean * scale
    return scale, shift


def init_params(key, latent_dim=LATENT_DIM):
    ks = jax.random.split(key, 8)
    p = {}
    p["w1"] = 0.05 * jax.random.normal(ks[0], (32, 1, 64), jnp.float32)
    p["bn1"] = _bn_affine(ks[1], 32)
    p["w2"] = 0.05 * jax.random.normal(ks[2], (64, 32, 32), jnp.float32)
    p["bn2"] = _bn_affine(ks[3], 64)
    p["w3"] = 0.05 * jax.random.normal(ks[4], (128, 64, 16), jnp.float32)
    p["bn3"] = _bn_affine(ks[5], 128)
    p["w_fc"] = 0.05 * jax.random.normal(ks[6], (latent_dim, 128), jnp.float32)
    p["b_fc"] = 0.05 * jax.random.normal(ks[7], (latent_dim,), jnp.float32)
    p["bn_fc"] = _bn_affine(jax.random.fold_in(key, 99), latent_dim)
    return p


# ---------------------------------------------------------------------------
# Fully-fused forward pass (one pallas_call, grid over batch)
# ---------------------------------------------------------------------------
def simple_sleep_net_forward(params, x_ncl):
    """x_ncl: (B, 1, L) float32 as in PyTorch. Returns (B, LATENT_DIM)."""
    B, cin0, L_in = x_ncl.shape
    assert cin0 == 1

    (C1, _, K1, S1, P1, D1) = CONV_CFG[0]
    (C2, _, K2, S2, P2, D2) = CONV_CFG[1]
    (C3, _, K3, S3, P3, D3) = CONV_CFG[2]

    # Full-resolution output lengths (PyTorch semantics).
    L1 = _out_len(L_in, K1, S1, P1, D1)
    L2 = _out_len(L1, K2, S2, P2, D2)
    L3 = _out_len(L2, K3, S3, P3, D3)

    # ---- even-phase reduction -------------------------------------------
    # conv2 reads padded conv1 output at l*S2 + k*D2; conv3 reads padded conv2
    # output at l*S3 + k*D3.  With stride, dilation and padding all even those
    # indices are always even -> odd-indexed conv1/conv2 outputs are dead.
    assert S2 % 2 == 0 and D2 % 2 == 0 and P2 % 2 == 0
    assert S3 % 2 == 0 and D3 % 2 == 0 and P3 % 2 == 0
    L1e = (L1 + 1) // 2              # conv1 outputs kept (even positions)
    L2e = (L2 + 1) // 2              # conv2 outputs kept (even positions)
    OFF1 = P2 // 2                   # row offset of a1e in even-padded buffer
    OFF2 = P3 // 2                   # row offset of a2e in even-padded buffer
    # e1 buffer row j holds padded1[2j]; conv2 (even out n) reads rows
    #   n*S2 + k*(D2//2)  -> strided taps (stride S2).
    # e2 buffer row j holds padded2[2j]; conv3 (out l) reads rows
    #   l*(S3//2) + k*(D3//2) -> contiguous taps when S3 == 2.
    E1_LEN = _round_up(max((L2e - 1) * S2 + (K2 - 1) * (D2 // 2) + 1,
                           OFF1 + L1e), 8)
    E2_LEN = _round_up(max((L3 - 1) * (S3 // 2) + (K3 - 1) * (D3 // 2) + 1,
                           OFF2 + L2e), 8)

    # ---- conv1 im2col at the input boundary (Cin=1, tiny; gives the MXU a
    # K1-deep contraction).  Only even conv1 outputs -> effective stride 2*S1.
    x = x_ncl[:, 0, :]                                        # (B, L_in)
    x_pad = jnp.pad(x, ((0, 0), (P1, P1)))
    idx = jnp.arange(L1e)[:, None] * (2 * S1) + jnp.arange(K1)[None, :]
    patches1 = x_pad[:, idx].astype(jnp.bfloat16)             # (B, L1e, K1)

    # ---- fold inference BatchNorm into the matmul weights ----
    def fold_conv(w, scale, shift):
        cout, cin, k = w.shape
        wm = jnp.transpose(w, (2, 1, 0)).reshape(k * cin, cout)  # row = k*cin+ci
        return ((wm * scale[None, :]).astype(jnp.bfloat16),
                shift.reshape(1, cout).astype(jnp.float32))

    w1m, b1 = fold_conv(params["w1"], *params["bn1"])         # (K1, C1), (1, C1)
    w2m, b2 = fold_conv(params["w2"], *params["bn2"])         # (K2*C1, C2), (1, C2)
    w3m, b3 = fold_conv(params["w3"], *params["bn3"])         # (K3*C2, C3), (1, C3)

    s_fc, sh_fc = params["bn_fc"]
    wfc = (params["w_fc"].T * s_fc[None, :]).astype(jnp.bfloat16)       # (C3, latent)
    bfc = (params["b_fc"] * s_fc + sh_fc).reshape(1, -1).astype(jnp.float32)
    latent = wfc.shape[1]

    def taps(ref, n_taps, tap_step, size, stride):
        """im2col over taps via (possibly strided) sublane slices of a VMEM ref."""
        pieces = []
        for k in range(n_taps):
            start = k * tap_step
            if stride == 1:
                pieces.append(ref[pl.ds(start, size), :])
            else:
                pieces.append(ref[pl.ds(start, size, stride), :])
        return jnp.concatenate(pieces, axis=-1)

    def kernel(p1_ref, w1_ref, b1_ref, w2_ref, b2_ref, w3_ref, b3_ref,
               wfc_ref, bfc_ref, out_ref, e1_ref, e2_ref):
        # ---- conv1 (even outputs only) + folded BN + Mish ----
        y1 = jnp.dot(p1_ref[0], w1_ref[...], preferred_element_type=jnp.float32)
        a1e = _mish(y1 + b1_ref[...])                         # (L1e, C1) f32

        # Stage into the even-index zero-padded VMEM buffer used by conv2.
        e1_ref[...] = jnp.zeros((E1_LEN, C1), jnp.float32)
        e1_ref[pl.ds(OFF1, L1e), :] = a1e

        # ---- conv2 (even outputs): strided taps, one deep MXU matmul ----
        p2 = taps(e1_ref, K2, D2 // 2, L2e, S2).astype(jnp.bfloat16)  # (L2e, K2*C1)
        y2 = jnp.dot(p2, w2_ref[...], preferred_element_type=jnp.float32)
        a2e = _mish(y2 + b2_ref[...])                         # (L2e, C2) f32

        e2_ref[...] = jnp.zeros((E2_LEN, C2), jnp.float32)
        e2_ref[pl.ds(OFF2, L2e), :] = a2e

        # ---- conv3 (all outputs): contiguous taps, one deep MXU matmul ----
        p3 = taps(e2_ref, K3, D3 // 2, L3, S3 // 2).astype(jnp.bfloat16)  # (L3, K3*C2)
        y3 = jnp.dot(p3, w3_ref[...], preferred_element_type=jnp.float32)
        a3 = _mish(y3 + b3_ref[...])                          # (L3, C3) f32

        # ---- head: mean-pool -> fc (+ folded BN) -> Mish -> L2 normalize ----
        pooled = jnp.mean(a3, axis=0, keepdims=True)          # (1, C3)
        y = jnp.dot(pooled.astype(jnp.bfloat16), wfc_ref[...],
                    preferred_element_type=jnp.float32) + bfc_ref[...]
        y = _mish(y)                                          # (1, latent)
        ssq = jnp.sum(y * y, axis=-1, keepdims=True)
        out_ref[0] = y * lax.rsqrt(jnp.maximum(ssq, 1e-24))   # F.normalize, eps=1e-12

    out = pl.pallas_call(
        kernel,
        out_shape=jax.ShapeDtypeStruct((B, 1, latent), jnp.float32),
        grid=(B,),
        in_specs=[
            pl.BlockSpec((1, L1e, K1), lambda b: (b, 0, 0)),  # per-batch conv1 patches
            pl.BlockSpec((K1 * 1, C1), lambda b: (0, 0)),     # weights: constant index
            pl.BlockSpec((1, C1), lambda b: (0, 0)),          #   -> fetched once, VMEM-resident
            pl.BlockSpec((K2 * C1, C2), lambda b: (0, 0)),
            pl.BlockSpec((1, C2), lambda b: (0, 0)),
            pl.BlockSpec((K3 * C2, C3), lambda b: (0, 0)),
            pl.BlockSpec((1, C3), lambda b: (0, 0)),
            pl.BlockSpec((C3, latent), lambda b: (0, 0)),
            pl.BlockSpec((1, latent), lambda b: (0, 0)),
        ],
        out_specs=pl.BlockSpec((1, 1, latent), lambda b: (b, 0, 0)),
        scratch_shapes=[
            pltpu.VMEM((E1_LEN, C1), jnp.float32),            # even-padded conv1 acts
            pltpu.VMEM((E2_LEN, C2), jnp.float32),            # even-padded conv2 acts
        ],
        compiler_params=pltpu.CompilerParams(
            dimension_semantics=("parallel",),                # batch axis -> megacore
        ),
    )(patches1, w1m, b1, w2m, b2, w3m, b3, wfc, bfc)

    # Dropout layers are identity in eval mode.
    return out.reshape(B, latent)


# ---------------------------------------------------------------------------
# Pure-JAX reference (full-resolution convs, f32) to validate the kernel
# ---------------------------------------------------------------------------
def reference_forward(params, x_ncl):
    def conv_bn_mish(x, w, bn, stride, pad, dil):
        scale, shift = bn
        y = lax.conv_general_dilated(
            x, w, window_strides=(stride,), padding=[(pad, pad)],
            rhs_dilation=(dil,), dimension_numbers=("NCH", "OIH", "NCH"),
            precision=lax.Precision.HIGHEST)
        y = y * scale[None, :, None] + shift[None, :, None]
        return _mish(y)

    h = conv_bn_mish(x_ncl, params["w1"], params["bn1"], 8, 63, 1)
    h = conv_bn_mish(h, params["w2"], params["bn2"], 4, 62, 2)
    h = conv_bn_mish(h, params["w3"], params["bn3"], 2, 60, 4)
    h = jnp.mean(h, axis=-1)                                  # adaptive_avg_pool1d(.,1)
    s, sh = params["bn_fc"]
    y = h @ params["w_fc"].T + params["b_fc"]
    y = _mish(y * s[None, :] + sh[None, :])
    n = jnp.sqrt(jnp.sum(y * y, axis=1, keepdims=True))
    return y / jnp.maximum(n, 1e-12)


if __name__ == "__main__":
    key = jax.random.PRNGKey(0)
    k_x, k_p = jax.random.split(key)

    B, L = 2, 256
    x = jax.random.normal(k_x, (B, 1, L), jnp.float32)        # (Batch, Channels=1, Length)
    params = init_params(k_p, latent_dim=LATENT_DIM)

    fwd = jax.jit(simple_sleep_net_forward)
    out = jax.block_until_ready(fwd(params, x))
    assert out.shape == (B, LATENT_DIM), out.shape

    norms = jnp.linalg.norm(out, axis=1)
    assert bool(jnp.all(jnp.abs(norms - 1.0) < 1e-3)), norms

    ref = jax.block_until_ready(reference_forward(params, x))
    max_err = float(jnp.max(jnp.abs(out - ref)))
    assert max_err < 5e-2, f"kernel deviates from reference: max_err={max_err}"

    print("KERNEL_OK")
</pallas_src>

<mosaic_0001>
module attributes {stable_mosaic.version = 11 : i64} {
  func.func @kernel(%arg0: i32, %arg1: memref<1x20x64xbf16, #tpu.memory_space<vmem>>, %arg2: memref<64x32xbf16, #tpu.memory_space<vmem>>, %arg3: memref<1x32xf32, #tpu.memory_space<vmem>>, %arg4: memref<1024x64xbf16, #tpu.memory_space<vmem>>, %arg5: memref<1x64xf32, #tpu.memory_space<vmem>>, %arg6: memref<1024x128xbf16, #tpu.memory_space<vmem>>, %arg7: memref<1x128xf32, #tpu.memory_space<vmem>>, %arg8: memref<128x128xbf16, #tpu.memory_space<vmem>>, %arg9: memref<1x128xf32, #tpu.memory_space<vmem>>, %arg10: memref<1x1x128xf32, #tpu.memory_space<vmem>>, %arg11: memref<80x32xf32, #tpu.memory_space<vmem>>, %arg12: memref<80x64xf32, #tpu.memory_space<vmem>>) attributes {dimension_semantics = [#tpu.dimension_semantics<parallel>], iteration_bounds = array<i64: 2>, scalar_prefetch = 0 : i64, scratch_operands = 2 : i64, tpu.core_type = #tpu.core_type<tc>, window_params = [{transform_indices = @transform_0, window_bounds = array<i64: 1, 20, 64>}, {pipeline_mode = #tpu.pipeline_mode<synchronous>, transform_indices = @transform_1, window_bounds = array<i64: 64, 32>}, {pipeline_mode = #tpu.pipeline_mode<synchronous>, transform_indices = @transform_2, window_bounds = array<i64: 1, 32>}, {pipeline_mode = #tpu.pipeline_mode<synchronous>, transform_indices = @transform_3, window_bounds = array<i64: 1024, 64>}, {pipeline_mode = #tpu.pipeline_mode<synchronous>, transform_indices = @transform_4, window_bounds = array<i64: 1, 64>}, {pipeline_mode = #tpu.pipeline_mode<synchronous>, transform_indices = @transform_5, window_bounds = array<i64: 1024, 128>}, {pipeline_mode = #tpu.pipeline_mode<synchronous>, transform_indices = @transform_6, window_bounds = array<i64: 1, 128>}, {pipeline_mode = #tpu.pipeline_mode<synchronous>, transform_indices = @transform_7, window_bounds = array<i64: 128, 128>}, {pipeline_mode = #tpu.pipeline_mode<synchronous>, transform_indices = @transform_8, window_bounds = array<i64: 1, 128>}, {transform_indices = @transform_9, window_bounds = array<i64: 1, 1, 128>}]} {
    %c0 = arith.constant 0 : index
    %c0_0 = arith.constant 0 : index
    %c0_1 = arith.constant 0 : index
    %0 = vector.load %arg1[%c0, %c0_0, %c0_1] : memref<1x20x64xbf16, #tpu.memory_space<vmem>>, vector<1x20x64xbf16>
    %1 = vector.shape_cast %0 : vector<1x20x64xbf16> to vector<20x64xbf16>
    %c0_2 = arith.constant 0 : index
    %c0_3 = arith.constant 0 : index
    %2 = vector.load %arg2[%c0_2, %c0_3] : memref<64x32xbf16, #tpu.memory_space<vmem>>, vector<64x32xbf16>
    %cst = arith.constant dense<0.000000e+00> : vector<20x32xf32>
    %3 = tpu.matmul %1, %2, %cst {dimension_numbers = #tpu.dot_dimension_numbers<[1], [0], [0], [1], [0, 0, 1, 1], [], []>} : vector<20x64xbf16>, vector<64x32xbf16>, vector<20x32xf32> -> vector<20x32xf32>
    %c0_4 = arith.constant 0 : index
    %c0_5 = arith.constant 0 : index
    %4 = vector.load %arg3[%c0_4, %c0_5] : memref<1x32xf32, #tpu.memory_space<vmem>>, vector<1x32xf32>
    %5 = vector.broadcast %4 : vector<1x32xf32> to vector<20x32xf32>
    %6 = arith.addf %3, %5 : vector<20x32xf32>
    %cst_6 = arith.constant 0.000000e+00 : f32
    %7 = vector.broadcast %cst_6 : f32 to vector<20x32xf32>
    %8 = arith.maximumf %6, %7 : vector<20x32xf32>
    %9 = vector.broadcast %cst_6 : f32 to vector<20x32xf32>
    %10 = arith.subf %6, %9 : vector<20x32xf32>
    %11 = arith.cmpf one, %10, %10 : vector<20x32xf32>
    %12 = vector.broadcast %cst_6 : f32 to vector<20x32xf32>
    %13 = arith.addf %6, %12 : vector<20x32xf32>
    %14 = math.absf %10 : vector<20x32xf32>
    %cst_7 = arith.constant 0.000000e+00 : f32
    %15 = vector.broadcast %cst_7 : f32 to vector<20x32xf32>
    %16 = arith.subf %15, %14 : vector<20x32xf32>
    %17 = math.exp %16 : vector<20x32xf32>
    %18 = math.log1p %17 : vector<20x32xf32>
    %19 = arith.addf %8, %18 : vector<20x32xf32>
    %20 = arith.select %11, %13, %19 : vector<20x32xi1>, vector<20x32xf32>
    %21 = math.tanh %20 : vector<20x32xf32>
    %22 = arith.mulf %6, %21 : vector<20x32xf32>
    %cst_8 = arith.constant 0.000000e+00 : f32
    %23 = vector.broadcast %cst_8 : f32 to vector<80x32xf32>
    %c0_9 = arith.constant 0 : index
    %c0_10 = arith.constant 0 : index
    %24 = vector.load %arg11[%c0_9, %c0_10] : memref<80x32xf32, #tpu.memory_space<vmem>>, vector<80x32xf32>
    tpu.vector_store %arg11[%c0_9, %c0_10], %23 {strides = array<i32>} : memref<80x32xf32, #tpu.memory_space<vmem>>, vector<80x32xf32>,
    %c31 = arith.constant 31 : index
    %c0_11 = arith.constant 0 : index
    %25 = vector.load %arg11[%c31, %c0_11] : memref<80x32xf32, #tpu.memory_space<vmem>>, vector<20x32xf32>
    tpu.vector_store %arg11[%c31, %c0_11], %22 {strides = array<i32>} : memref<80x32xf32, #tpu.memory_space<vmem>>, vector<20x32xf32>,
    %c0_12 = arith.constant 0 : index
    %c0_13 = arith.constant 0 : index
    %26 = tpu.strided_load %arg11[%c0_12, %c0_13] {strides = array<i32: 4, 1>} : memref<80x32xf32, #tpu.memory_space<vmem>>, vector<13x32xf32>
    %c1 = arith.constant 1 : index
    %c0_14 = arith.constant 0 : index
    %27 = tpu.strided_load %arg11[%c1, %c0_14] {strides = array<i32: 4, 1>} : memref<80x32xf32, #tpu.memory_space<vmem>>, vector<13x32xf32>
    %c2 = arith.constant 2 : index
    %c0_15 = arith.constant 0 : index
    %28 = tpu.strided_load %arg11[%c2, %c0_15] {strides = array<i32: 4, 1>} : memref<80x32xf32, #tpu.memory_space<vmem>>, vector<13x32xf32>
    %c3 = arith.constant 3 : index
    %c0_16 = arith.constant 0 : index
    %29 = tpu.strided_load %arg11[%c3, %c0_16] {strides = array<i32: 4, 1>} : memref<80x32xf32, #tpu.memory_space<vmem>>, vector<13x32xf32>
    %c4 = arith.constant 4 : index
    %c0_17 = arith.constant 0 : index
    %30 = tpu.strided_load %arg11[%c4, %c0_17] {strides = array<i32: 4, 1>} : memref<80x32xf32, #tpu.memory_space<vmem>>, vector<13x32xf32>
    %c5 = arith.constant 5 : index
    %c0_18 = arith.constant 0 : index
    %31 = tpu.strided_load %arg11[%c5, %c0_18] {strides = array<i32: 4, 1>} : memref<80x32xf32, #tpu.memory_space<vmem>>, vector<13x32xf32>
    %c6 = arith.constant 6 : index
    %c0_19 = arith.constant 0 : index
    %32 = tpu.strided_load %arg11[%c6, %c0_19] {strides = array<i32: 4, 1>} : memref<80x32xf32, #tpu.memory_space<vmem>>, vector<13x32xf32>
    %c7 = arith.constant 7 : index
    %c0_20 = arith.constant 0 : index
    %33 = tpu.strided_load %arg11[%c7, %c0_20] {strides = array<i32: 4, 1>} : memref<80x32xf32, #tpu.memory_space<vmem>>, vector<13x32xf32>
    %c8 = arith.constant 8 : index
    %c0_21 = arith.constant 0 : index
    %34 = tpu.strided_load %arg11[%c8, %c0_21] {strides = array<i32: 4, 1>} : memref<80x32xf32, #tpu.memory_space<vmem>>, vector<13x32xf32>
    %c9 = arith.constant 9 : index
    %c0_22 = arith.constant 0 : index
    %35 = tpu.strided_load %arg11[%c9, %c0_22] {strides = array<i32: 4, 1>} : memref<80x32xf32, #tpu.memory_space<vmem>>, vector<13x32xf32>
    %c10 = arith.constant 10 : index
    %c0_23 = arith.constant 0 : index
    %36 = tpu.strided_load %arg11[%c10, %c0_23] {strides = array<i32: 4, 1>} : memref<80x32xf32, #tpu.memory_space<vmem>>, vector<13x32xf32>
    %c11 = arith.constant 11 : index
    %c0_24 = arith.constant 0 : index
    %37 = tpu.strided_load %arg11[%c11, %c0_24] {strides = array<i32: 4, 1>} : memref<80x32xf32, #tpu.memory_space<vmem>>, vector<13x32xf32>
    %c12 = arith.constant 12 : index
    %c0_25 = arith.constant 0 : index
    %38 = tpu.strided_load %arg11[%c12, %c0_25] {strides = array<i32: 4, 1>} : memref<80x32xf32, #tpu.memory_space<vmem>>, vector<13x32xf32>
    %c13 = arith.constant 13 : index
    %c0_26 = arith.constant 0 : index
    %39 = tpu.strided_load %arg11[%c13, %c0_26] {strides = array<i32: 4, 1>} : memref<80x32xf32, #tpu.memory_space<vmem>>, vector<13x32xf32>
    %c14 = arith.constant 14 : index
    %c0_27 = arith.constant 0 : index
    %40 = tpu.strided_load %arg11[%c14, %c0_27] {strides = array<i32: 4, 1>} : memref<80x32xf32, #tpu.memory_space<vmem>>, vector<13x32xf32>
    %c15 = arith.constant 15 : index
    %c0_28 = arith.constant 0 : index
    %41 = tpu.strided_load %arg11[%c15, %c0_28] {strides = array<i32: 4, 1>} : memref<80x32xf32, #tpu.memory_space<vmem>>, vector<13x32xf32>
    %c16 = arith.constant 16 : index
    %c0_29 = arith.constant 0 : index
    %42 = tpu.strided_load %arg11[%c16, %c0_29] {strides = array<i32: 4, 1>} : memref<80x32xf32, #tpu.memory_space<vmem>>, vector<13x32xf32>
    %c17 = arith.constant 17 : index
    %c0_30 = arith.constant 0 : index
    %43 = tpu.strided_load %arg11[%c17, %c0_30] {strides = array<i32: 4, 1>} : memref<80x32xf32, #tpu.memory_space<vmem>>, vector<13x32xf32>
    %c18 = arith.constant 18 : index
    %c0_31 = arith.constant 0 : index
    %44 = tpu.strided_load %arg11[%c18, %c0_31] {strides = array<i32: 4, 1>} : memref<80x32xf32, #tpu.memory_space<vmem>>, vector<13x32xf32>
    %c19 = arith.constant 19 : index
    %c0_32 = arith.constant 0 : index
    %45 = tpu.strided_load %arg11[%c19, %c0_32] {strides = array<i32: 4, 1>} : memref<80x32xf32, #tpu.memory_space<vmem>>, vector<13x32xf32>
    %c20 = arith.constant 20 : index
    %c0_33 = arith.constant 0 : index
    %46 = tpu.strided_load %arg11[%c20, %c0_33] {strides = array<i32: 4, 1>} : memref<80x32xf32, #tpu.memory_space<vmem>>, vector<13x32xf32>
    %c21 = arith.constant 21 : index
    %c0_34 = arith.constant 0 : index
    %47 = tpu.strided_load %arg11[%c21, %c0_34] {strides = array<i32: 4, 1>} : memref<80x32xf32, #tpu.memory_space<vmem>>, vector<13x32xf32>
    %c22 = arith.constant 22 : index
    %c0_35 = arith.constant 0 : index
    %48 = tpu.strided_load %arg11[%c22, %c0_35] {strides = array<i32: 4, 1>} : memref<80x32xf32, #tpu.memory_space<vmem>>, vector<13x32xf32>
    %c23 = arith.constant 23 : index
    %c0_36 = arith.constant 0 : index
    %49 = tpu.strided_load %arg11[%c23, %c0_36] {strides = array<i32: 4, 1>} : memref<80x32xf32, #tpu.memory_space<vmem>>, vector<13x32xf32>
    %c24 = arith.constant 24 : index
    %c0_37 = arith.constant 0 : index
    %50 = tpu.strided_load %arg11[%c24, %c0_37] {strides = array<i32: 4, 1>} : memref<80x32xf32, #tpu.memory_space<vmem>>, vector<13x32xf32>
    %c25 = arith.constant 25 : index
    %c0_38 = arith.constant 0 : index
    %51 = tpu.strided_load %arg11[%c25, %c0_38] {strides = array<i32: 4, 1>} : memref<80x32xf32, #tpu.memory_space<vmem>>, vector<13x32xf32>
    %c26 = arith.constant 26 : index
    %c0_39 = arith.constant 0 : index
    %52 = tpu.strided_load %arg11[%c26, %c0_39] {strides = array<i32: 4, 1>} : memref<80x32xf32, #tpu.memory_space<vmem>>, vector<13x32xf32>
    %c27 = arith.constant 27 : index
    %c0_40 = arith.constant 0 : index
    %53 = tpu.strided_load %arg11[%c27, %c0_40] {strides = array<i32: 4, 1>} : memref<80x32xf32, #tpu.memory_space<vmem>>, vector<13x32xf32>
    %c28 = arith.constant 28 : index
    %c0_41 = arith.constant 0 : index
    %54 = tpu.strided_load %arg11[%c28, %c0_41] {strides = array<i32: 4, 1>} : memref<80x32xf32, #tpu.memory_space<vmem>>, vector<13x32xf32>
    %c29 = arith.constant 29 : index
    %c0_42 = arith.constant 0 : index
    %55 = tpu.strided_load %arg11[%c29, %c0_42] {strides = array<i32: 4, 1>} : memref<80x32xf32, #tpu.memory_space<vmem>>, vector<13x32xf32>
    %c30 = arith.constant 30 : index
    %c0_43 = arith.constant 0 : index
    %56 = tpu.strided_load %arg11[%c30, %c0_43] {strides = array<i32: 4, 1>} : memref<80x32xf32, #tpu.memory_space<vmem>>, vector<13x32xf32>
    %c31_44 = arith.constant 31 : index
    %c0_45 = arith.constant 0 : index
    %57 = tpu.strided_load %arg11[%c31_44, %c0_45] {strides = array<i32: 4, 1>} : memref<80x32xf32, #tpu.memory_space<vmem>>, vector<13x32xf32>
    %58 = tpu.concatenate %26, %27, %28, %29, %30, %31, %32, %33, %34, %35, %36, %37, %38, %39, %40, %41 in 1 : vector<13x32xf32>, vector<13x32xf32>, vector<13x32xf32>, vector<13x32xf32>, vector<13x32xf32>, vector<13x32xf32>, vector<13x32xf32>, vector<13x32xf32>, vector<13x32xf32>, vector<13x32xf32>, vector<13x32xf32>, vector<13x32xf32>, vector<13x32xf32>, vector<13x32xf32>, vector<13x32xf32>, vector<13x32xf32> -> vector<13x512xf32>
    %59 = tpu.concatenate %42, %43, %44, %45, %46, %47, %48, %49, %50, %51, %52, %53, %54, %55, %56, %57 in 1 : vector<13x32xf32>, vector<13x32xf32>, vector<13x32xf32>, vector<13x32xf32>, vector<13x32xf32>, vector<13x32xf32>, vector<13x32xf32>, vector<13x32xf32>, vector<13x32xf32>, vector<13x32xf32>, vector<13x32xf32>, vector<13x32xf32>, vector<13x32xf32>, vector<13x32xf32>, vector<13x32xf32>, vector<13x32xf32> -> vector<13x512xf32>
    %60 = tpu.concatenate %58, %59 in 1 : vector<13x512xf32>, vector<13x512xf32> -> vector<13x1024xf32>
    %61 = arith.truncf %60 : vector<13x1024xf32> to vector<13x1024xbf16>
    %c0_46 = arith.constant 0 : index
    %c0_47 = arith.constant 0 : index
    %62 = vector.load %arg4[%c0_46, %c0_47] : memref<1024x64xbf16, #tpu.memory_space<vmem>>, vector<1024x64xbf16>
    %cst_48 = arith.constant dense<0.000000e+00> : vector<13x64xf32>
    %63 = tpu.matmul %61, %62, %cst_48 {dimension_numbers = #tpu.dot_dimension_numbers<[1], [0], [0], [1], [0, 0, 1, 1], [], []>} : vector<13x1024xbf16>, vector<1024x64xbf16>, vector<13x64xf32> -> vector<13x64xf32>
    %c0_49 = arith.constant 0 : index
    %c0_50 = arith.constant 0 : index
    %64 = vector.load %arg5[%c0_49, %c0_50] : memref<1x64xf32, #tpu.memory_space<vmem>>, vector<1x64xf32>
    %65 = vector.broadcast %64 : vector<1x64xf32> to vector<13x64xf32>
    %66 = arith.addf %63, %65 : vector<13x64xf32>
    %cst_51 = arith.constant 0.000000e+00 : f32
    %67 = vector.broadcast %cst_51 : f32 to vector<13x64xf32>
    %68 = arith.maximumf %66, %67 : vector<13x64xf32>
    %69 = vector.broadcast %cst_51 : f32 to vector<13x64xf32>
    %70 = arith.subf %66, %69 : vector<13x64xf32>
    %71 = arith.cmpf one, %70, %70 : vector<13x64xf32>
    %72 = vector.broadcast %cst_51 : f32 to vector<13x64xf32>
    %73 = arith.addf %66, %72 : vector<13x64xf32>
    %74 = math.absf %70 : vector<13x64xf32>
    %cst_52 = arith.constant 0.000000e+00 : f32
    %75 = vector.broadcast %cst_52 : f32 to vector<13x64xf32>
    %76 = arith.subf %75, %74 : vector<13x64xf32>
    %77 = math.exp %76 : vector<13x64xf32>
    %78 = math.log1p %77 : vector<13x64xf32>
    %79 = arith.addf %68, %78 : vector<13x64xf32>
    %80 = arith.select %71, %73, %79 : vector<13x64xi1>, vector<13x64xf32>
    %81 = math.tanh %80 : vector<13x64xf32>
    %82 = arith.mulf %66, %81 : vector<13x64xf32>
    %cst_53 = arith.constant 0.000000e+00 : f32
    %83 = vector.broadcast %cst_53 : f32 to vector<80x64xf32>
    %c0_54 = arith.constant 0 : index
    %c0_55 = arith.constant 0 : index
    %84 = vector.load %arg12[%c0_54, %c0_55] : memref<80x64xf32, #tpu.memory_space<vmem>>, vector<80x64xf32>
    tpu.vector_store %arg12[%c0_54, %c0_55], %83 {strides = array<i32>} : memref<80x64xf32, #tpu.memory_space<vmem>>, vector<80x64xf32>,
    %c30_56 = arith.constant 30 : index
    %c0_57 = arith.constant 0 : index
    %85 = vector.load %arg12[%c30_56, %c0_57] : memref<80x64xf32, #tpu.memory_space<vmem>>, vector<13x64xf32>
    tpu.vector_store %arg12[%c30_56, %c0_57], %82 {strides = array<i32>} : memref<80x64xf32, #tpu.memory_space<vmem>>, vector<13x64xf32>,
    %c0_58 = arith.constant 0 : index
    %c0_59 = arith.constant 0 : index
    %86 = vector.load %arg12[%c0_58, %c0_59] : memref<80x64xf32, #tpu.memory_space<vmem>>, vector<43x64xf32>
    %c2_60 = arith.constant 2 : index
    %c0_61 = arith.constant 0 : index
    %87 = vector.load %arg12[%c2_60, %c0_61] : memref<80x64xf32, #tpu.memory_space<vmem>>, vector<43x64xf32>
    %c4_62 = arith.constant 4 : index
    %c0_63 = arith.constant 0 : index
    %88 = vector.load %arg12[%c4_62, %c0_63] : memref<80x64xf32, #tpu.memory_space<vmem>>, vector<43x64xf32>
    %c6_64 = arith.constant 6 : index
    %c0_65 = arith.constant 0 : index
    %89 = vector.load %arg12[%c6_64, %c0_65] : memref<80x64xf32, #tpu.memory_space<vmem>>, vector<43x64xf32>
    %c8_66 = arith.constant 8 : index
    %c0_67 = arith.constant 0 : index
    %90 = vector.load %arg12[%c8_66, %c0_67] : memref<80x64xf32, #tpu.memory_space<vmem>>, vector<43x64xf32>
    %c10_68 = arith.constant 10 : index
    %c0_69 = arith.constant 0 : index
    %91 = vector.load %arg12[%c10_68, %c0_69] : memref<80x64xf32, #tpu.memory_space<vmem>>, vector<43x64xf32>
    %c12_70 = arith.constant 12 : index
    %c0_71 = arith.constant 0 : index
    %92 = vector.load %arg12[%c12_70, %c0_71] : memref<80x64xf32, #tpu.memory_space<vmem>>, vector<43x64xf32>
    %c14_72 = arith.constant 14 : index
    %c0_73 = arith.constant 0 : index
    %93 = vector.load %arg12[%c14_72, %c0_73] : memref<80x64xf32, #tpu.memory_space<vmem>>, vector<43x64xf32>
    %c16_74 = arith.constant 16 : index
    %c0_75 = arith.constant 0 : index
    %94 = vector.load %arg12[%c16_74, %c0_75] : memref<80x64xf32, #tpu.memory_space<vmem>>, vector<43x64xf32>
    %c18_76 = arith.constant 18 : index
    %c0_77 = arith.constant 0 : index
    %95 = vector.load %arg12[%c18_76, %c0_77] : memref<80x64xf32, #tpu.memory_space<vmem>>, vector<43x64xf32>
    %c20_78 = arith.constant 20 : index
    %c0_79 = arith.constant 0 : index
    %96 = vector.load %arg12[%c20_78, %c0_79] : memref<80x64xf32, #tpu.memory_space<vmem>>, vector<43x64xf32>
    %c22_80 = arith.constant 22 : index
    %c0_81 = arith.constant 0 : index
    %97 = vector.load %arg12[%c22_80, %c0_81] : memref<80x64xf32, #tpu.memory_space<vmem>>, vector<43x64xf32>
    %c24_82 = arith.constant 24 : index
    %c0_83 = arith.constant 0 : index
    %98 = vector.load %arg12[%c24_82, %c0_83] : memref<80x64xf32, #tpu.memory_space<vmem>>, vector<43x64xf32>
    %c26_84 = arith.constant 26 : index
    %c0_85 = arith.constant 0 : index
    %99 = vector.load %arg12[%c26_84, %c0_85] : memref<80x64xf32, #tpu.memory_space<vmem>>, vector<43x64xf32>
    %c28_86 = arith.constant 28 : index
    %c0_87 = arith.constant 0 : index
    %100 = vector.load %arg12[%c28_86, %c0_87] : memref<80x64xf32, #tpu.memory_space<vmem>>, vector<43x64xf32>
    %c30_88 = arith.constant 30 : index
    %c0_89 = arith.constant 0 : index
    %101 = vector.load %arg12[%c30_88, %c0_89] : memref<80x64xf32, #tpu.memory_space<vmem>>, vector<43x64xf32>
    %102 = tpu.concatenate %86, %87, %88, %89, %90, %91, %92, %93, %94, %95, %96, %97, %98, %99, %100, %101 in 1 : vector<43x64xf32>, vector<43x64xf32>, vector<43x64xf32>, vector<43x64xf32>, vector<43x64xf32>, vector<43x64xf32>, vector<43x64xf32>, vector<43x64xf32>, vector<43x64xf32>, vector<43x64xf32>, vector<43x64xf32>, vector<43x64xf32>, vector<43x64xf32>, vector<43x64xf32>, vector<43x64xf32>, vector<43x64xf32> -> vector<43x1024xf32>
    %103 = arith.truncf %102 : vector<43x1024xf32> to vector<43x1024xbf16>
    %c0_90 = arith.constant 0 : index
    %c0_91 = arith.constant 0 : index
    %104 = vector.load %arg6[%c0_90, %c0_91] : memref<1024x128xbf16, #tpu.memory_space<vmem>>, vector<1024x128xbf16>
    %cst_92 = arith.constant dense<0.000000e+00> : vector<43x128xf32>
    %105 = tpu.matmul %103, %104, %cst_92 {dimension_numbers = #tpu.dot_dimension_numbers<[1], [0], [0], [1], [0, 0, 1, 1], [], []>} : vector<43x1024xbf16>, vector<1024x128xbf16>, vector<43x128xf32> -> vector<43x128xf32>
    %c0_93 = arith.constant 0 : index
    %c0_94 = arith.constant 0 : index
    %106 = vector.load %arg7[%c0_93, %c0_94] : memref<1x128xf32, #tpu.memory_space<vmem>>, vector<1x128xf32>
    %107 = vector.broadcast %106 : vector<1x128xf32> to vector<43x128xf32>
    %108 = arith.addf %105, %107 : vector<43x128xf32>
    %cst_95 = arith.constant 0.000000e+00 : f32
    %109 = vector.broadcast %cst_95 : f32 to vector<43x128xf32>
    %110 = arith.maximumf %108, %109 : vector<43x128xf32>
    %111 = vector.broadcast %cst_95 : f32 to vector<43x128xf32>
    %112 = arith.subf %108, %111 : vector<43x128xf32>
    %113 = arith.cmpf one, %112, %112 : vector<43x128xf32>
    %114 = vector.broadcast %cst_95 : f32 to vector<43x128xf32>
    %115 = arith.addf %108, %114 : vector<43x128xf32>
    %116 = math.absf %112 : vector<43x128xf32>
    %cst_96 = arith.constant 0.000000e+00 : f32
    %117 = vector.broadcast %cst_96 : f32 to vector<43x128xf32>
    %118 = arith.subf %117, %116 : vector<43x128xf32>
    %119 = math.exp %118 : vector<43x128xf32>
    %120 = math.log1p %119 : vector<43x128xf32>
    %121 = arith.addf %110, %120 : vector<43x128xf32>
    %122 = arith.select %113, %115, %121 : vector<43x128xi1>, vector<43x128xf32>
    %123 = math.tanh %122 : vector<43x128xf32>
    %124 = arith.mulf %108, %123 : vector<43x128xf32>
    %cst_97 = arith.constant dense<0.000000e+00> : vector<128xf32>
    %125 = vector.multi_reduction <add>, %124, %cst_97 [0] : vector<43x128xf32> to vector<128xf32>
    %126 = vector.shape_cast %125 : vector<128xf32> to vector<1x128xf32>
    %cst_98 = arith.constant 4.300000e+01 : f32
    %127 = vector.broadcast %cst_98 : f32 to vector<1x128xf32>
    %128 = arith.divf %126, %127 : vector<1x128xf32>
    %129 = arith.truncf %128 : vector<1x128xf32> to vector<1x128xbf16>
    %c0_99 = arith.constant 0 : index
    %c0_100 = arith.constant 0 : index
    %130 = vector.load %arg8[%c0_99, %c0_100] : memref<128x128xbf16, #tpu.memory_space<vmem>>, vector<128x128xbf16>
    %cst_101 = arith.constant dense<0.000000e+00> : vector<1x128xf32>
    %131 = tpu.matmul %129, %130, %cst_101 {dimension_numbers = #tpu.dot_dimension_numbers<[1], [0], [0], [1], [0, 0, 1, 1], [], []>} : vector<1x128xbf16>, vector<128x128xbf16>, vector<1x128xf32> -> vector<1x128xf32>
    %c0_102 = arith.constant 0 : index
    %c0_103 = arith.constant 0 : index
    %132 = vector.load %arg9[%c0_102, %c0_103] : memref<1x128xf32, #tpu.memory_space<vmem>>, vector<1x128xf32>
    %133 = arith.addf %131, %132 : vector<1x128xf32>
    %cst_104 = arith.constant 0.000000e+00 : f32
    %134 = vector.broadcast %cst_104 : f32 to vector<1x128xf32>
    %135 = arith.maximumf %133, %134 : vector<1x128xf32>
    %136 = vector.broadcast %cst_104 : f32 to vector<1x128xf32>
    %137 = arith.subf %133, %136 : vector<1x128xf32>
    %138 = arith.cmpf one, %137, %137 : vector<1x128xf32>
    %139 = vector.broadcast %cst_104 : f32 to vector<1x128xf32>
    %140 = arith.addf %133, %139 : vector<1x128xf32>
    %141 = math.absf %137 : vector<1x128xf32>
    %cst_105 = arith.constant 0.000000e+00 : f32
    %142 = vector.broadcast %cst_105 : f32 to vector<1x128xf32>
    %143 = arith.subf %142, %141 : vector<1x128xf32>
    %144 = math.exp %143 : vector<1x128xf32>
    %145 = math.log1p %144 : vector<1x128xf32>
    %146 = arith.addf %135, %145 : vector<1x128xf32>
    %147 = arith.select %138, %140, %146 : vector<1x128xi1>, vector<1x128xf32>
    %148 = math.tanh %147 : vector<1x128xf32>
    %149 = arith.mulf %133, %148 : vector<1x128xf32>
    %150 = arith.mulf %149, %149 : vector<1x128xf32>
    %cst_106 = arith.constant dense<0.000000e+00> : vector<1xf32>
    %151 = vector.multi_reduction <add>, %150, %cst_106 [1] : vector<1x128xf32> to vector<1xf32>
    %152 = vector.shape_cast %151 : vector<1xf32> to vector<1x1xf32>
    %cst_107 = arith.constant 1.000000e-24 : f32
    %153 = vector.broadcast %cst_107 : f32 to vector<1x1xf32>
    %154 = arith.maximumf %152, %153 : vector<1x1xf32>
    %155 = math.rsqrt %154 : vector<1x1xf32>
    %156 = vector.broadcast %155 : vector<1x1xf32> to vector<1x128xf32>
    %157 = arith.mulf %149, %156 : vector<1x128xf32>
    %c0_108 = arith.constant 0 : index
    %c0_109 = arith.constant 0 : index
    %c0_110 = arith.constant 0 : index
    %158 = vector.load %arg10[%c0_108, %c0_109, %c0_110] : memref<1x1x128xf32, #tpu.memory_space<vmem>>, vector<1x1x128xf32>
    %159 = vector.shape_cast %158 : vector<1x1x128xf32> to vector<1x128xf32>
    %160 = vector.shape_cast %157 : vector<1x128xf32> to vector<1x1x128xf32>
    tpu.vector_store %arg10[%c0_108, %c0_109, %c0_110], %160 {strides = array<i32>} : memref<1x1x128xf32, #tpu.memory_space<vmem>>, vector<1x1x128xf32>,
    return
  }
  func.func @transform_0(%arg0: i32) -> (i32, i32, i32) {
    %c0_i32 = arith.constant 0 : i32
    %c0_i32_0 = arith.constant 0 : i32
    %c0_i32_1 = arith.constant 0 : i32
    return %arg0, %c0_i32, %c0_i32_0 : i32, i32, i32
  }
  func.func @transform_1(%arg0: i32) -> (i32, i32) {
    %c0_i32 = arith.constant 0 : i32
    %c0_i32_0 = arith.constant 0 : i32
    %c0_i32_1 = arith.constant 0 : i32
    return %c0_i32, %c0_i32_0 : i32, i32
  }
  func.func @transform_2(%arg0: i32) -> (i32, i32) {
    %c0_i32 = arith.constant 0 : i32
    %c0_i32_0 = arith.constant 0 : i32
    %c0_i32_1 = arith.constant 0 : i32
    return %c0_i32, %c0_i32_0 : i32, i32
  }
  func.func @transform_3(%arg0: i32) -> (i32, i32) {
    %c0_i32 = arith.constant 0 : i32
    %c0_i32_0 = arith.constant 0 : i32
    %c0_i32_1 = arith.constant 0 : i32
    return %c0_i32, %c0_i32_0 : i32, i32
  }
  func.func @transform_4(%arg0: i32) -> (i32, i32) {
    %c0_i32 = arith.constant 0 : i32
    %c0_i32_0 = arith.constant 0 : i32
    %c0_i32_1 = arith.constant 0 : i32
    return %c0_i32, %c0_i32_0 : i32, i32
  }
  func.func @transform_5(%arg0: i32) -> (i32, i32) {
    %c0_i32 = arith.constant 0 : i32
    %c0_i32_0 = arith.constant 0 : i32
    %c0_i32_1 = arith.constant 0 : i32
    return %c0_i32, %c0_i32_0 : i32, i32
  }
  func.func @transform_6(%arg0: i32) -> (i32, i32) {
    %c0_i32 = arith.constant 0 : i32
    %c0_i32_0 = arith.constant 0 : i32
    %c0_i32_1 = arith.constant 0 : i32
    return %c0_i32, %c0_i32_0 : i32, i32
  }
  func.func @transform_7(%arg0: i32) -> (i32, i32) {
    %c0_i32 = arith.constant 0 : i32
    %c0_i32_0 = arith.constant 0 : i32
    %c0_i32_1 = arith.constant 0 : i32
    return %c0_i32, %c0_i32_0 : i32, i32
  }
  func.func @transform_8(%arg0: i32) -> (i32, i32) {
    %c0_i32 = arith.constant 0 : i32
    %c0_i32_0 = arith.constant 0 : i32
    %c0_i32_1 = arith.constant 0 : i32
    return %c0_i32, %c0_i32_0 : i32, i32
  }
  func.func @transform_9(%arg0: i32) -> (i32, i32, i32) {
    %c0_i32 = arith.constant 0 : i32
    %c0_i32_0 = arith.constant 0 : i32
    %c0_i32_1 = arith.constant 0 : i32
    return %arg0, %c0_i32, %c0_i32_0 : i32, i32, i32
  }
}

</mosaic_0001>

<llo_original>
// kernel: simple_sleep_net_forward.1
$region0: #{simple_sleep_net_forward.1}
  #allocation0 [shape = 'u32[]', space=smem, size = 0x4, offset = 0x4, fixed_abs, tag = 'smem constant byte address 0x4 - core index']
  #allocation1 [shape = 'u32[144,128]{1,0:T(1,128)}', space=vmem, size = 0x12000, scoped, tag = 'internal scratch']
  #allocation2 [shape = 'f32[80,32]{1,0:T(8,128)}', space=vmem, size = 0xa000, scoped, tag = 'scratch operand']
  #allocation3 [shape = 'f32[80,64]{1,0:T(8,128)}', space=vmem, size = 0xa000, scoped, tag = 'scratch operand']
  %s0 = inlined_call_operand.vmem [shape: bf16[2,20,64], index: 0, kind: input, shape index: {}]
  %s1 = inlined_call_operand.vmem [shape: bf16[64,32], index: 1, kind: input, shape index: {}]
  %s2 = inlined_call_operand.vmem [shape: f32[1,32], index: 2, kind: input, shape index: {}]
  %s3 = inlined_call_operand.vmem [shape: bf16[1024,64], index: 3, kind: input, shape index: {}]
  %s4 = inlined_call_operand.vmem [shape: f32[1,64], index: 4, kind: input, shape index: {}]
  %s5 = inlined_call_operand.vmem [shape: bf16[1024,128], index: 5, kind: input, shape index: {}]
  %s6 = inlined_call_operand.vmem [shape: f32[1,128], index: 6, kind: input, shape index: {}]
  %s7 = inlined_call_operand.vmem [shape: bf16[128,128], index: 7, kind: input, shape index: {}]
  %s8 = inlined_call_operand.vmem [shape: f32[1,128], index: 8, kind: input, shape index: {}]
  %s9 = inlined_call_operand.hbm [shape: f32[2,1,128], index: 9, kind: output, shape index: {}]
  %s10 = sld [smem:[#allocation0]]
  $region69: #{simple_sleep_net_forward.1} parent=0
    _
  %s12 = ssub.s32 1, %s10
  %s13 = scalar_select 0, %s12, %s10
  $region1: #{simple_sleep_net_forward.1} parent=0
    #allocation4 [shape = 'u8[1024]{0}', space=vmem, size = 0x400, scoped, tag = 'output window, operand 0']
    #allocation5 [shape = 's32[2]{0}', space=sflag, size = 0x8, scoped, tag = 'scoped memory for simple_sleep_net_forward.1']
    %14 = vsyncpa [#allocation5], 0
    %s15 = scalar_lea.sflag [#allocation5], 1
    %16 = vsyncpa %s15, 0
    loop: start=0, step=1, limit=4
    $region2: #{simple_sleep_net_forward.1} parent=1 // loop_pre_header
      _
    $region3: #{simple_sleep_net_forward.1} parent=1 // loop_header
      %s18 = sphi 0, %s22
      %p19 = scmp.ge.s32.totalorder %s18, 4
      %s28 = sphi 0, %s30
      %s31 = sphi 0, %s28
      %s32 = sphi 0, %s31
      %s48 = sphi 0, %s32
      %s52 = sphi 0, %s52
      %s54 = sphi 0, %s52
      %s55 = sphi 0, %s54
      %s69 = sphi 0, %s55
      %s73 = sphi 0, %s73
      %s75 = sphi 0, %s73
      %s76 = sphi 0, %s75
      %s90 = sphi 0, %s76
      %s94 = sphi 0, %s94
      %s96 = sphi 0, %s94
      %s97 = sphi 0, %s96
      %s111 = sphi 0, %s97
      %s115 = sphi 0, %s115
      %s117 = sphi 0, %s115
      %s118 = sphi 0, %s117
      %s132 = sphi 0, %s118
      %s136 = sphi 0, %s136
      %s138 = sphi 0, %s136
      %s139 = sphi 0, %s138
      %s153 = sphi 0, %s139
      %s157 = sphi 0, %s157
      %s159 = sphi 0, %s157
      %s160 = sphi 0, %s159
      %s174 = sphi 0, %s160
      %s178 = sphi 0, %s178
      %s180 = sphi 0, %s178
      %s181 = sphi 0, %s180
      %s195 = sphi 0, %s181
      %s199 = sphi 0, %s199
      %s201 = sphi 0, %s199
      %s202 = sphi 0, %s201
      %s216 = sphi 0, %s202
      %s222 = sphi 0, %s224
      %s225 = sphi 0, %s222
      %s226 = sphi 0, %s225
      %s242 = sphi 0, %s226
    $region4: #{simple_sleep_net_forward.1} parent=1 // loop_header_branch
      %21 = sbr.rel (%p19) target = $region8
    $region5: #{simple_sleep_net_forward.1} parent=1 // loop_body
      %s23 = ssub.s32 %s18, 1
      %s24 = ssub.s32 %s18, 2
      %s25 = sadd.s32 %s18, 1
      %s26 = ssub.s32 %s18, %s25
      %p27 = scmp.eq.s32.totalorder %s26, 0
      %s29 = sadd.s32 %s28, 1
      %s30 = scalar_select %p27, %s28, %s29
      %p33 = pneg %p27
      %p34 = scmp.eq.s32.totalorder %s18, 1
      %p35 = por %p33, %p34
      %p36 = scmp.ne.s32.totalorder %s28, %s31
      %p37 = scmp.eq.s32.totalorder %s18, 0
      %p38 = por %p36, %p37
      %p39 = scmp.ne.s32.totalorder %s28, %s31
      %p40 = scmp.eq.s32.totalorder %s23, 1
      %p41 = por %p39, %p40
      %p42 = scmp.ne.s32.totalorder %s31, %s32
      %p43 = scmp.eq.s32.totalorder %s23, 0
      %p44 = por %p42, %p43
      %p45 = scmp.ne.s32.totalorder %s31, %s32
      %p46 = scmp.eq.s32.totalorder %s24, 1
      %p47 = por %p45, %p46
      %p49 = scmp.ne.s32.totalorder %s32, %s48
      %p50 = scmp.eq.s32.totalorder %s24, 0
      %p51 = por %p49, %p50
      %s53 = sadd.s32 %s52, 1
      %p56 = scmp.eq.s32.totalorder %s18, 1
      %p57 = scmp.ne.s32.totalorder %s52, %s54
      %p58 = scmp.eq.s32.totalorder %s18, 0
      %p59 = por %p57, %p58
      %p60 = scmp.ne.s32.totalorder %s52, %s54
      %p61 = scmp.eq.s32.totalorder %s23, 1
      %p62 = por %p60, %p61
      %p63 = scmp.ne.s32.totalorder %s54, %s55
      %p64 = scmp.eq.s32.totalorder %s23, 0
      %p65 = por %p63, %p64
      %p66 = scmp.ne.s32.totalorder %s54, %s55
      %p67 = scmp.eq.s32.totalorder %s24, 1
      %p68 = por %p66, %p67
      %p70 = scmp.ne.s32.totalorder %s55, %s69
      %p71 = scmp.eq.s32.totalorder %s24, 0
      %p72 = por %p70, %p71
      %s74 = sadd.s32 %s73, 1
      %p77 = scmp.eq.s32.totalorder %s18, 1
      %p78 = scmp.ne.s32.totalorder %s73, %s75
      %p79 = scmp.eq.s32.totalorder %s18, 0
      %p80 = por %p78, %p79
      %p81 = scmp.ne.s32.totalorder %s73, %s75
      %p82 = scmp.eq.s32.totalorder %s23, 1
      %p83 = por %p81, %p82
      %p84 = scmp.ne.s32.totalorder %s75, %s76
      %p85 = scmp.eq.s32.totalorder %s23, 0
      %p86 = por %p84, %p85
      %p87 = scmp.ne.s32.totalorder %s75, %s76
      %p88 = scmp.eq.s32.totalorder %s24, 1
      %p89 = por %p87, %p88
      %p91 = scmp.ne.s32.totalorder %s76, %s90
      %p92 = scmp.eq.s32.totalorder %s24, 0
      %p93 = por %p91, %p92
      %s95 = sadd.s32 %s94, 1
      %p98 = scmp.eq.s32.totalorder %s18, 1
      %p99 = scmp.ne.s32.totalorder %s94, %s96
      %p100 = scmp.eq.s32.totalorder %s18, 0
      %p101 = por %p99, %p100
      %p102 = scmp.ne.s32.totalorder %s94, %s96
      %p103 = scmp.eq.s32.totalorder %s23, 1
      %p104 = por %p102, %p103
      %p105 = scmp.ne.s32.totalorder %s96, %s97
      %p106 = scmp.eq.s32.totalorder %s23, 0
      %p107 = por %p105, %p106
      %p108 = scmp.ne.s32.totalorder %s96, %s97
      %p109 = scmp.eq.s32.totalorder %s24, 1
      %p110 = por %p108, %p109
      %p112 = scmp.ne.s32.totalorder %s97, %s111
      %p113 = scmp.eq.s32.totalorder %s24, 0
      %p114 = por %p112, %p113
      %s116 = sadd.s32 %s115, 1
      %p119 = scmp.eq.s32.totalorder %s18, 1
      %p120 = scmp.ne.s32.totalorder %s115, %s117
      %p121 = scmp.eq.s32.totalorder %s18, 0
      %p122 = por %p120, %p121
      %p123 = scmp.ne.s32.totalorder %s115, %s117
      %p124 = scmp.eq.s32.totalorder %s23, 1
      %p125 = por %p123, %p124
      %p126 = scmp.ne.s32.totalorder %s117, %s118
      %p127 = scmp.eq.s32.totalorder %s23, 0
      %p128 = por %p126, %p127
      %p129 = scmp.ne.s32.totalorder %s117, %s118
      %p130 = scmp.eq.s32.totalorder %s24, 1
      %p131 = por %p129, %p130
      %p133 = scmp.ne.s32.totalorder %s118, %s132
      %p134 = scmp.eq.s32.totalorder %s24, 0
      %p135 = por %p133, %p134
      %s137 = sadd.s32 %s136, 1
      %p140 = scmp.eq.s32.totalorder %s18, 1
      %p141 = scmp.ne.s32.totalorder %s136, %s138
      %p142 = scmp.eq.s32.totalorder %s18, 0
      %p143 = por %p141, %p142
      %p144 = scmp.ne.s32.totalorder %s136, %s138
      %p145 = scmp.eq.s32.totalorder %s23, 1
      %p146 = por %p144, %p145
      %p147 = scmp.ne.s32.totalorder %s138, %s139
      %p148 = scmp.eq.s32.totalorder %s23, 0
      %p149 = por %p147, %p148
      %p150 = scmp.ne.s32.totalorder %s138, %s139
      %p151 = scmp.eq.s32.totalorder %s24, 1
      %p152 = por %p150, %p151
      %p154 = scmp.ne.s32.totalorder %s139, %s153
      %p155 = scmp.eq.s32.totalorder %s24, 0
      %p156 = por %p154, %p155
      %s158 = sadd.s32 %s157, 1
      %p161 = scmp.eq.s32.totalorder %s18, 1
      %p162 = scmp.ne.s32.totalorder %s157, %s159
      %p163 = scmp.eq.s32.totalorder %s18, 0
      %p164 = por %p162, %p163
      %p165 = scmp.ne.s32.totalorder %s157, %s159
      %p166 = scmp.eq.s32.totalorder %s23, 1
      %p167 = por %p165, %p166
      %p168 = scmp.ne.s32.totalorder %s159, %s160
      %p169 = scmp.eq.s32.totalorder %s23, 0
      %p170 = por %p168, %p169
      %p171 = scmp.ne.s32.totalorder %s159, %s160
      %p172 = scmp.eq.s32.totalorder %s24, 1
      %p173 = por %p171, %p172
      %p175 = scmp.ne.s32.totalorder %s160, %s174
      %p176 = scmp.eq.s32.totalorder %s24, 0
      %p177 = por %p175, %p176
      %s179 = sadd.s32 %s178, 1
      %p182 = scmp.eq.s32.totalorder %s18, 1
      %p183 = scmp.ne.s32.totalorder %s178, %s180
      %p184 = scmp.eq.s32.totalorder %s18, 0
      %p185 = por %p183, %p184
      %p186 = scmp.ne.s32.totalorder %s178, %s180
      %p187 = scmp.eq.s32.totalorder %s23, 1
      %p188 = por %p186, %p187
      %p189 = scmp.ne.s32.totalorder %s180, %s181
      %p190 = scmp.eq.s32.totalorder %s23, 0
      %p191 = por %p189, %p190
      %p192 = scmp.ne.s32.totalorder %s180, %s181
      %p193 = scmp.eq.s32.totalorder %s24, 1
      %p194 = por %p192, %p193
      %p196 = scmp.ne.s32.totalorder %s181, %s195
      %p197 = scmp.eq.s32.totalorder %s24, 0
      %p198 = por %p196, %p197
      %s200 = sadd.s32 %s199, 1
      %p203 = scmp.eq.s32.totalorder %s18, 1
      %p204 = scmp.ne.s32.totalorder %s199, %s201
      %p205 = scmp.eq.s32.totalorder %s18, 0
      %p206 = por %p204, %p205
      %p207 = scmp.ne.s32.totalorder %s199, %s201
      %p208 = scmp.eq.s32.totalorder %s23, 1
      %p209 = por %p207, %p208
      %p210 = scmp.ne.s32.totalorder %s201, %s202
      %p211 = scmp.eq.s32.totalorder %s23, 0
      %p212 = por %p210, %p211
      %p213 = scmp.ne.s32.totalorder %s201, %s202
      %p214 = scmp.eq.s32.totalorder %s24, 1
      %p215 = por %p213, %p214
      %p217 = scmp.ne.s32.totalorder %s202, %s216
      %p218 = scmp.eq.s32.totalorder %s24, 0
      %p219 = por %p217, %p218
      %s220 = ssub.s32 %s18, %s25
      %p221 = scmp.eq.s32.totalorder %s220, 0
      %s223 = sadd.s32 %s222, 1
      %s224 = scalar_select %p221, %s222, %s223
      %p227 = pneg %p221
      %p228 = scmp.eq.s32.totalorder %s18, 1
      %p229 = por %p227, %p228
      %p230 = scmp.ne.s32.totalorder %s222, %s225
      %p231 = scmp.eq.s32.totalorder %s18, 0
      %p232 = por %p230, %p231
      %p233 = scmp.ne.s32.totalorder %s222, %s225
      %p234 = scmp.eq.s32.totalorder %s23, 1
      %p235 = por %p233, %p234
      %p236 = scmp.ne.s32.totalorder %s225, %s226
      %p237 = scmp.eq.s32.totalorder %s23, 0
      %p238 = por %p236, %p237
      %p239 = scmp.ne.s32.totalorder %s225, %s226
      %p240 = scmp.eq.s32.totalorder %s24, 1
      %p241 = por %p239, %p240
      %p243 = scmp.ne.s32.totalorder %s226, %s242
      %p244 = scmp.eq.s32.totalorder %s24, 0
      %p245 = por %p243, %p244
      %p246 = scmp.le.s32.totalorder 1, %s18
      %p247 = scmp.lt.s32.totalorder %s18, 3
      %p248 = pnand %p246, %p247
      %p249 = pneg %p248
      // Predicated region
      $region9: #{simple_sleep_net_forward.1} parent=5 // pred_check
        _
      $region10: #{simple_sleep_net_forward.1} parent=5 // pred_check_branch
        %251 = sbr.rel (%p248) target = $region12
      $region11: #{simple_sleep_net_forward.1} parent=5 // pred_region
        %s252 = ssub.s32 %s18, 1
        // Predicated region
        $region13: #{simple_sleep_net_forward.1} parent=11 // pred_check
          %p253 = pneg %p65
        $region14: #{simple_sleep_net_forward.1} parent=11 // pred_check_branch
          %255 = sbr.rel (%p253) target = $region16
        $region15: #{simple_sleep_net_forward.1} parent=11 // pred_region
          _
        $region16: #{simple_sleep_net_forward.1} parent=11 // pred_fallthru
          _
        // Predicated region
        $region17: #{simple_sleep_net_forward.1} parent=11 // pred_check
          %p256 = pneg %p86
        $region18: #{simple_sleep_net_forward.1} parent=11 // pred_check_branch
          %258 = sbr.rel (%p256) target = $region20
        $region19: #{simple_sleep_net_forward.1} parent=11 // pred_region
          _
        $region20: #{simple_sleep_net_forward.1} parent=11 // pred_fallthru
          _
        // Predicated region
        $region21: #{simple_sleep_net_forward.1} parent=11 // pred_check
          %p259 = pneg %p107
        $region22: #{simple_sleep_net_forward.1} parent=11 // pred_check_branch
          %261 = sbr.rel (%p259) target = $region24
        $region23: #{simple_sleep_net_forward.1} parent=11 // pred_region
          _
        $region24: #{simple_sleep_net_forward.1} parent=11 // pred_fallthru
          _
        // Predicated region
        $region25: #{simple_sleep_net_forward.1} parent=11 // pred_check
          %p262 = pneg %p128
        $region26: #{simple_sleep_net_forward.1} parent=11 // pred_check_branch
          %264 = sbr.rel (%p262) target = $region28
        $region27: #{simple_sleep_net_forward.1} parent=11 // pred_region
          _
        $region28: #{simple_sleep_net_forward.1} parent=11 // pred_fallthru
          _
        // Predicated region
        $region29: #{simple_sleep_net_forward.1} parent=11 // pred_check
          %p265 = pneg %p149
        $region30: #{simple_sleep_net_forward.1} parent=11 // pred_check_branch
          %267 = sbr.rel (%p265) target = $region32
        $region31: #{simple_sleep_net_forward.1} parent=11 // pred_region
          _
        $region32: #{simple_sleep_net_forward.1} parent=11 // pred_fallthru
          _
        // Predicated region
        $region33: #{simple_sleep_net_forward.1} parent=11 // pred_check
          %p268 = pneg %p170
        $region34: #{simple_sleep_net_forward.1} parent=11 // pred_check_branch
          %270 = sbr.rel (%p268) target = $region36
        $region35: #{simple_sleep_net_forward.1} parent=11 // pred_region
          _
        $region36: #{simple_sleep_net_forward.1} parent=11 // pred_fallthru
          _
        // Predicated region
        $region37: #{simple_sleep_net_forward.1} parent=11 // pred_check
          %p271 = pneg %p191
        $region38: #{simple_sleep_net_forward.1} parent=11 // pred_check_branch
          %273 = sbr.rel (%p271) target = $region40
        $region39: #{simple_sleep_net_forward.1} parent=11 // pred_region
          _
        $region40: #{simple_sleep_net_forward.1} parent=11 // pred_fallthru
          _
        // Predicated region
        $region41: #{simple_sleep_net_forward.1} parent=11 // pred_check
          %p274 = pneg %p212
        $region42: #{simple_sleep_net_forward.1} parent=11 // pred_check_branch
          %276 = sbr.rel (%p274) target = $region44
        $region43: #{simple_sleep_net_forward.1} parent=11 // pred_region
          _
        $region44: #{simple_sleep_net_forward.1} parent=11 // pred_fallthru
          _
      $region12: #{simple_sleep_net_forward.1} parent=5 // pred_fallthru
        _
      %p277 = scmp.lt.s32.totalorder %s18, 2
      // Predicated region
      $region45: #{simple_sleep_net_forward.1} parent=5 // pred_check
        %p278 = pneg %p277
      $region46: #{simple_sleep_net_forward.1} parent=5 // pred_check_branch
        %280 = sbr.rel (%p278) target = $region48
      $region47: #{simple_sleep_net_forward.1} parent=5 // pred_region
        // Predicated region
        $region49: #{simple_sleep_net_forward.1} parent=47 // pred_check
          %p281 = pneg %p38
        $region50: #{simple_sleep_net_forward.1} parent=47 // pred_check_branch
          %283 = sbr.rel (%p281) target = $region52
        $region51: #{simple_sleep_net_forward.1} parent=47 // pred_region
          %p284 = scmp.lt.s32.totalorder %s18, 1
          %s285 = scalar_select %p284, %s18, 1
          %s286 = smul.addr %s285, 3
          %s287 = smul.addr %s286, 4
          %s288 = scalar_lea.vmem %s0, %s287
        $region52: #{simple_sleep_net_forward.1} parent=47 // pred_fallthru
          _
      $region48: #{simple_sleep_net_forward.1} parent=5 // pred_fallthru
        _
      %p289 = scmp.le.s32.totalorder 1, %s18
      %p290 = scmp.lt.s32.totalorder %s18, 3
      %p291 = pnand %p289, %p290
      %p292 = pneg %p291
      // Predicated region
      $region53: #{simple_sleep_net_forward.1} parent=5 // pred_check
        _
      $region54: #{simple_sleep_net_forward.1} parent=5 // pred_check_branch
        %294 = sbr.rel (%p291) target = $region56
      $region55: #{simple_sleep_net_forward.1} parent=5 // pred_region
        %s295 = ssub.s32 %s18, 1
        %p296 = scmp.lt.s32.totalorder %s23, 1
        %s297 = scalar_select %p296, %s23, 1
        %s298 = smul.addr %s297, 3
        %s299 = smul.addr %s298, 4
        %s300 = scalar_lea.vmem %s0, %s299
        %p301 = pneg %p44
        %p302 = pneg %p41
        %p303 = pneg %p65
        %p304 = pneg %p62
        %p305 = pneg %p86
        %p306 = pneg %p83
        %p307 = pneg %p107
        %p308 = pneg %p104
        %p309 = pneg %p128
        %p310 = pneg %p125
        %p311 = pneg %p149
        %p312 = pneg %p146
        %p313 = pneg %p170
        %p314 = pneg %p167
        %p315 = pneg %p191
        %p316 = pneg %p188
        %p317 = pneg %p212
        %p318 = pneg %p209
        %p319 = pneg %p238
        %p320 = pneg %p235
        %s321 = sand.u32 %s225, 1
        %s322 = scalar_lea.sflag [#allocation5], %s321
        %s323 = sand.u32 %s225, 1
        %s324 = scalar_lea.vmem [#allocation4], %s323
        %p325 = scmp.lt.s32.totalorder %s23, 1
        %s326 = scalar_select %p325, %s23, 1
        %s327 = smul.addr %s326, 3
        %s328 = smul.addr %s327, 4
        %s329 = scalar_lea.vmem %s0, %s328
        %v331 = vld [vmem:[%s329] sm:$0xf]
        %v332 = vld [vmem:[%s329 + $0x4] sm:$0xf]
        %v333 = vld [vmem:[%s329 + $0x8] sm:$0x3]
        %v334 = vld [vmem:[%s1] sm:$0xf]
        %v335 = vld [vmem:[%s1 + $0x4] sm:$0xf]
        %v336 = vld [vmem:[%s1 + $0x8] sm:$0xf]
        %v337 = vld [vmem:[%s1 + $0xc] sm:$0xf]
        %v338 = vld [vmem:[%s1 + $0x10] sm:$0xf]
        %v339 = vld [vmem:[%s1 + $0x14] sm:$0xf]
        %v340 = vld [vmem:[%s1 + $0x18] sm:$0xf]
        %v341 = vld [vmem:[%s1 + $0x1c] sm:$0xf]
        %v342 = vld [vmem:[%s2] sm:$0x1]
        %v344 = vlaneseq
        %v345 = vshrl.u32 %v344, 7
        %v346 = vsub.s32 0, %v345
        %v347 = vrot.slane %v342, %v346
        %v352 = vunpack.c.l.b16 %v331
        %v353 = vunpack.c.l.b16 %v332
        %v354 = vunpack.c.l.b16 %v333
        %v355 = vpack.c.b16 %v353, %v352
        %v356 = vpack.c.b16 %v354, %v354
        %v365 = vunpack.c.l.b16 %v334
        %v366 = vunpack.c.l.b16 %v335
        %v367 = vunpack.c.l.b16 %v336
        %v368 = vunpack.c.l.b16 %v337
        %v369 = vunpack.c.l.b16 %v338
        %v370 = vunpack.c.l.b16 %v339
        %v371 = vunpack.c.l.b16 %v340
        %v372 = vunpack.c.l.b16 %v341
        %v373 = vpack.c.b16 %v366, %v365
        %v374 = vpack.c.b16 %v368, %v367
        %v375 = vpack.c.b16 %v370, %v369
        %v376 = vpack.c.b16 %v372, %v371
        %vm381 = vcmask 523264
        %v383 = vsel %vm381, %v355, 0
        %v386 = vsel %vm381, %v356, 0
        %388 = vmatprep.subr.bf16.mxu0 0
        %389 = vmatpush1.bf16.msra.mxu0 0
        %390 = vmatprep.subr.bf16.mxu0 0
        %391 = vmatpush1.bf16.msra.mxu0 0
        %392 = vmatprep.subr.bf16.mxu0 0
        %393 = vmatpush1.bf16.msra.mxu0 0
        %394 = vmatprep.subr.bf16.mxu0 0
        %395 = vmatpush1.bf16.msra.mxu0 0
        %396 = vmatprep.subr.bf16.mxu0 0
        %397 = vmatpush1.bf16.msra.mxu0 %v376
        %398 = vmatprep.subr.bf16.mxu0 0
        %399 = vmatpush1.bf16.msra.mxu0 %v375
        %400 = vmatprep.subr.bf16.mxu0 0
        %401 = vmatpush1.bf16.msra.mxu0 %v374
        %402 = vmatprep.subr.bf16.mxu0 0
        %403 = vmatpush1.bf16.msra.mxu0 %v373
        %404 = vmatprep.subr.bf16.mxu0 0
        %405 = vmatpush2.bf16.msra.mxu0 0
        %406 = vmatprep.subr.bf16.mxu0 0
        %407 = vmatpush2.bf16.msra.mxu0 0
        %408 = vmatprep.subr.bf16.mxu0 0
        %409 = vmatpush2.bf16.msra.mxu0 0
        %410 = vmatprep.subr.bf16.mxu0 0
        %411 = vmatpush2.bf16.msra.mxu0 0
        %412 = vmatprep.subr.bf16.mxu0 0
        %413 = vmatpush2.bf16.msra.mxu0 0
        %414 = vmatprep.subr.bf16.mxu0 0
        %415 = vmatpush2.bf16.msra.mxu0 0
        %416 = vmatprep.subr.bf16.mxu0 0
        %417 = vmatpush2.bf16.msra.mxu0 0
        %418 = vmatprep.subr.bf16.mxu0 0
        %419 = vmatpush2.bf16.msra.mxu0 0
        %420 = vmatprep.mubr.bf16.mxu0 0
        %421 = vmatmul.mubr.bf16.gmra.mxu0 %v383
        %v422 = vpop.f32.mrf.mxu0
        %v423 = vadd.f32 %v347, %v422
        %v424 = vpop.f32.mrf.mxu0
        %v425 = vpop.f32.mrf.mxu0
        %v426 = vadd.f32 %v347, %v425
        %v427 = vpop.f32.mrf.mxu0
        %428 = vmatprep.mubr.bf16.mxu0 0
        %429 = vmatmul.mubr.bf16.gmra.mxu0 %v386
        %v430 = vpop.f32.mrf.mxu0
        %v431 = vadd.f32 %v347, %v430
        %v432 = vpop.f32.mrf.mxu0
        %v433 = vpop.f32.mrf.mxu0
        %v434 = vpop.f32.mrf.mxu0
        %435 = vdwg.mxu0
        %v436 = vmax.f32 %v423, 0.0
        %v437 = vmax.f32 %v426, 0.0
        %v438 = vmax.f32 %v431, 0.0
        %vm439 = vcmp.ne.f32.partialorder %v423, %v423
        %vm440 = vcmp.ne.f32.partialorder %v426, %v426
        %vm441 = vcmp.ne.f32.partialorder %v431, %v431
        %v442 = vadd.f32 %v423, 0.0
        %v443 = vadd.f32 %v426, 0.0
        %v444 = vadd.f32 %v431, 0.0
        %v445 = vand.u32 2147483647, %v423
        %v446 = vand.u32 2147483647, %v426
        %v447 = vand.u32 2147483647, %v431
        %v448 = vsub.f32 0.0, %v445
        %v449 = vsub.f32 0.0, %v446
        %v450 = vsub.f32 0.0, %v447
        %v451 = vmul.f32 %v448, 1.442695
        %v452 = vpow.pop %v451
        %v453 = vmul.f32 %v449, 1.442695
        %v454 = vpow.pop %v453
        %v455 = vmul.f32 %v450, 1.442695
        %v456 = vpow.pop %v455
        %v457 = vadd.f32 %v452, 1.0
        %v458 = vlog2.pop %v457
        %v459 = vmul.f32 %v458, 0.6931472
        %v460 = vmul.f32 -0.5, %v452
        %v461 = vadd.f32 %v460, 1.0
        %v462 = vmul.f32 %v461, %v452
        %v463 = vand.u32 2147483647, %v452
        %vm464 = vcmp.lt.f32.partialorder %v463, 0.0004427343
        %v465 = vsel %vm464, %v462, %v459
        %v466 = vadd.f32 %v454, 1.0
        %v467 = vlog2.pop %v466
        %v468 = vmul.f32 %v467, 0.6931472
        %v469 = vmul.f32 -0.5, %v454
        %v470 = vadd.f32 %v469, 1.0
        %v471 = vmul.f32 %v470, %v454
        %v472 = vand.u32 2147483647, %v454
        %vm473 = vcmp.lt.f32.partialorder %v472, 0.0004427343
        %v474 = vsel %vm473, %v471, %v468
        %v475 = vadd.f32 %v456, 1.0
        %v476 = vlog2.pop %v475
        %v477 = vmul.f32 %v476, 0.6931472
        %v478 = vmul.f32 -0.5, %v456
        %v479 = vadd.f32 %v478, 1.0
        %v480 = vmul.f32 %v479, %v456
        %v481 = vand.u32 2147483647, %v456
        %vm482 = vcmp.lt.f32.partialorder %v481, 0.0004427343
        %v483 = vsel %vm482, %v480, %v477
        %v484 = vadd.f32 %v436, %v465
        %v485 = vadd.f32 %v437, %v474
        %v486 = vadd.f32 %v438, %v483
        %v487 = vsel %vm439, %v442, %v484
        %v488 = vsel %vm440, %v443, %v485
        %v489 = vsel %vm441, %v444, %v486
        %v490 = vtanh.pop %v487
        %v491 = vtanh.pop %v488
        %v492 = vtanh.pop %v489
        %v493 = vmul.f32 %v423, %v490
        %v494 = vmul.f32 %v426, %v491
        %v495 = vmul.f32 %v431, %v492
        %vm496 = vcmask 261120
        %497 = vst.msk [vmem:[#allocation2] sm:$0xff] %vm496, 0.0
        %498 = vst.msk [vmem:[#allocation2 + $0x8] sm:$0xff] %vm496, 0.0
        %499 = vst.msk [vmem:[#allocation2 + $0x10] sm:$0xff] %vm496, 0.0
        %500 = vst.msk [vmem:[#allocation2 + $0x18] sm:$0xff] %vm496, 0.0
        %501 = vst.msk [vmem:[#allocation2 + $0x20] sm:$0xff] %vm496, 0.0
        %502 = vst.msk [vmem:[#allocation2 + $0x28] sm:$0xff] %vm496, 0.0
        %503 = vst.msk [vmem:[#allocation2 + $0x30] sm:$0xff] %vm496, 0.0
        %504 = vst.msk [vmem:[#allocation2 + $0x38] sm:$0xff] %vm496, 0.0
        %505 = vst.msk [vmem:[#allocation2 + $0x40] sm:$0xff] %vm496, 0.0
        %506 = vst.msk [vmem:[#allocation2 + $0x48] sm:$0xff] %vm496, 0.0
        %507 = vst.msk [vmem:[#allocation2 + $0x1f] sm:$0xff] %vm496, %v493
        %508 = vst.msk [vmem:[#allocation2 + $0x27] sm:$0xff] %vm496, %v494
        %vm509 = vcmask 257024
        %510 = vst.msk [vmem:[#allocation2 + $0x2f] sm:$0xf] %vm509, %v495
        %v511 = vld [vmem:[#allocation2] ss:$4 sm:$0xff]
        %s512 = scalar_lea.vmem [#allocation2], 32
        %v513 = vld [vmem:[%s512] ss:$4 sm:$0x1f]
        %s514 = scalar_lea.vmem [#allocation2], 1
        %v515 = vld [vmem:[%s514] ss:$4 sm:$0xff]
        %s516 = scalar_lea.vmem [#allocation2], 33
        %v517 = vld [vmem:[%s516] ss:$4 sm:$0x1f]
        %s518 = scalar_lea.vmem [#allocation2], 2
        %v519 = vld [vmem:[%s518] ss:$4 sm:$0xff]
        %s520 = scalar_lea.vmem [#allocation2], 34
        %v521 = vld [vmem:[%s520] ss:$4 sm:$0x1f]
        %s522 = scalar_lea.vmem [#allocation2], 3
        %v523 = vld [vmem:[%s522] ss:$4 sm:$0xff]
        %s524 = scalar_lea.vmem [#allocation2], 35
        %v525 = vld [vmem:[%s524] ss:$4 sm:$0x1f]
        %s526 = scalar_lea.vmem [#allocation2], 4
        %v527 = vld [vmem:[%s526] ss:$4 sm:$0xff]
        %s528 = scalar_lea.vmem [#allocation2], 36
        %v529 = vld [vmem:[%s528] ss:$4 sm:$0x1f]
        %s530 = scalar_lea.vmem [#allocation2], 5
        %v531 = vld [vmem:[%s530] ss:$4 sm:$0xff]
        %s532 = scalar_lea.vmem [#allocation2], 37
        %v533 = vld [vmem:[%s532] ss:$4 sm:$0x1f]
        %s534 = scalar_lea.vmem [#allocation2], 6
        %v535 = vld [vmem:[%s534] ss:$4 sm:$0xff]
        %s536 = scalar_lea.vmem [#allocation2], 38
        %v537 = vld [vmem:[%s536] ss:$4 sm:$0x1f]
        %s538 = scalar_lea.vmem [#allocation2], 7
        %v539 = vld [vmem:[%s538] ss:$4 sm:$0xff]
        %s540 = scalar_lea.vmem [#allocation2], 39
        %v541 = vld [vmem:[%s540] ss:$4 sm:$0x1f]
        %s542 = scalar_lea.vmem [#allocation2], 8
        %v543 = vld [vmem:[%s542] ss:$4 sm:$0xff]
        %s544 = scalar_lea.vmem [#allocation2], 40
        %v545 = vld [vmem:[%s544] ss:$4 sm:$0x1f]
        %s546 = scalar_lea.vmem [#allocation2], 9
        %v547 = vld [vmem:[%s546] ss:$4 sm:$0xff]
        %s548 = scalar_lea.vmem [#allocation2], 41
        %v549 = vld [vmem:[%s548] ss:$4 sm:$0x1f]
        %s550 = scalar_lea.vmem [#allocation2], 10
        %v551 = vld [vmem:[%s550] ss:$4 sm:$0xff]
        %s552 = scalar_lea.vmem [#allocation2], 42
        %v553 = vld [vmem:[%s552] ss:$4 sm:$0x1f]
        %s554 = scalar_lea.vmem [#allocation2], 11
        %v555 = vld [vmem:[%s554] ss:$4 sm:$0xff]
        %s556 = scalar_lea.vmem [#allocation2], 43
        %v557 = vld [vmem:[%s556] ss:$4 sm:$0x1f]
        %s558 = scalar_lea.vmem [#allocation2], 12
        %v559 = vld [vmem:[%s558] ss:$4 sm:$0xff]
        %s560 = scalar_lea.vmem [#allocation2], 44
        %v561 = vld [vmem:[%s560] ss:$4 sm:$0x1f]
        %s562 = scalar_lea.vmem [#allocation2], 13
        %v563 = vld [vmem:[%s562] ss:$4 sm:$0xff]
        %s564 = scalar_lea.vmem [#allocation2], 45
        %v565 = vld [vmem:[%s564] ss:$4 sm:$0x1f]
        %s566 = scalar_lea.vmem [#allocation2], 14
        %v567 = vld [vmem:[%s566] ss:$4 sm:$0xff]
        %s568 = scalar_lea.vmem [#allocation2], 46
        %v569 = vld [vmem:[%s568] ss:$4 sm:$0x1f]
        %s570 = scalar_lea.vmem [#allocation2], 15
        %v571 = vld [vmem:[%s570] ss:$4 sm:$0xff]
        %s572 = scalar_lea.vmem [#allocation2], 47
        %v573 = vld [vmem:[%s572] ss:$4 sm:$0x1f]
        %s574 = scalar_lea.vmem [#allocation2], 16
        %v575 = vld [vmem:[%s574] ss:$4 sm:$0xff]
        %s576 = scalar_lea.vmem [#allocation2], 48
        %v577 = vld [vmem:[%s576] ss:$4 sm:$0x1f]
        %s578 = scalar_lea.vmem [#allocation2], 17
        %v579 = vld [vmem:[%s578] ss:$4 sm:$0xff]
        %s580 = scalar_lea.vmem [#allocation2], 49
        %v581 = vld [vmem:[%s580] ss:$4 sm:$0x1f]
        %s582 = scalar_lea.vmem [#allocation2], 18
        %v583 = vld [vmem:[%s582] ss:$4 sm:$0xff]
        %s584 = scalar_lea.vmem [#allocation2], 50
        %v585 = vld [vmem:[%s584] ss:$4 sm:$0x1f]
        %s586 = scalar_lea.vmem [#allocation2], 19
        %v587 = vld [vmem:[%s586] ss:$4 sm:$0xff]
        %s588 = scalar_lea.vmem [#allocation2], 51
        %v589 = vld [vmem:[%s588] ss:$4 sm:$0x1f]
        %s590 = scalar_lea.vmem [#allocation2], 20
        %v591 = vld [vmem:[%s590] ss:$4 sm:$0xff]
        %s592 = scalar_lea.vmem [#allocation2], 52
        %v593 = vld [vmem:[%s592] ss:$4 sm:$0x1f]
        %s594 = scalar_lea.vmem [#allocation2], 21
        %v595 = vld [vmem:[%s594] ss:$4 sm:$0xff]
        %s596 = scalar_lea.vmem [#allocation2], 53
        %v597 = vld [vmem:[%s596] ss:$4 sm:$0x1f]
        %s598 = scalar_lea.vmem [#allocation2], 22
        %v599 = vld [vmem:[%s598] ss:$4 sm:$0xff]
        %s600 = scalar_lea.vmem [#allocation2], 54
        %v601 = vld [vmem:[%s600] ss:$4 sm:$0x1f]
        %s602 = scalar_lea.vmem [#allocation2], 23
        %v603 = vld [vmem:[%s602] ss:$4 sm:$0xff]
        %s604 = scalar_lea.vmem [#allocation2], 55
        %v605 = vld [vmem:[%s604] ss:$4 sm:$0x1f]
        %s606 = scalar_lea.vmem [#allocation2], 24
        %v607 = vld [vmem:[%s606] ss:$4 sm:$0xff]
        %s608 = scalar_lea.vmem [#allocation2], 56
        %v609 = vld [vmem:[%s608] ss:$4 sm:$0x1f]
        %s610 = scalar_lea.vmem [#allocation2], 25
        %v611 = vld [vmem:[%s610] ss:$4 sm:$0xff]
        %s612 = scalar_lea.vmem [#allocation2], 57
        %v613 = vld [vmem:[%s612] ss:$4 sm:$0x1f]
        %s614 = scalar_lea.vmem [#allocation2], 26
        %v615 = vld [vmem:[%s614] ss:$4 sm:$0xff]
        %s616 = scalar_lea.vmem [#allocation2], 58
        %v617 = vld [vmem:[%s616] ss:$4 sm:$0x1f]
        %s618 = scalar_lea.vmem [#allocation2], 27
        %v619 = vld [vmem:[%s618] ss:$4 sm:$0xff]
        %s620 = scalar_lea.vmem [#allocation2], 59
        %v621 = vld [vmem:[%s620] ss:$4 sm:$0x1f]
        %s622 = scalar_lea.vmem [#allocation2], 28
        %v623 = vld [vmem:[%s622] ss:$4 sm:$0xff]
        %s624 = scalar_lea.vmem [#allocation2], 60
        %v625 = vld [vmem:[%s624] ss:$4 sm:$0x1f]
        %s626 = scalar_lea.vmem [#allocation2], 29
        %v627 = vld [vmem:[%s626] ss:$4 sm:$0xff]
        %s628 = scalar_lea.vmem [#allocation2], 61
        %v629 = vld [vmem:[%s628] ss:$4 sm:$0x1f]
        %s630 = scalar_lea.vmem [#allocation2], 30
        %v631 = vld [vmem:[%s630] ss:$4 sm:$0xff]
        %s632 = scalar_lea.vmem [#allocation2], 62
        %v633 = vld [vmem:[%s632] ss:$4 sm:$0x1f]
        %s634 = scalar_lea.vmem [#allocation2], 31
        %v635 = vld [vmem:[%s634] ss:$4 sm:$0xff]
        %s636 = scalar_lea.vmem [#allocation2], 63
        %v637 = vld [vmem:[%s636] ss:$4 sm:$0x1f]
        %640 = vrot.lane.b32.xlu0 %v515, 32
        %v641 = vpop.permute.xlu0 %640
        %642 = vrot.lane.b32.xlu0 %v517, 32
        %v643 = vpop.permute.xlu0 %642
        %648 = vrot.lane.b32.xlu0 %v519, 64
        %v649 = vpop.permute.xlu0 %648
        %650 = vrot.lane.b32.xlu0 %v521, 64
        %v651 = vpop.permute.xlu0 %650
        %656 = vrot.lane.b32.xlu0 %v523, 96
        %v657 = vpop.permute.xlu0 %656
        %658 = vrot.lane.b32.xlu0 %v525, 96
        %v659 = vpop.permute.xlu0 %658
        %664 = vrot.lane.b32.xlu0 %v531, 32
        %v665 = vpop.permute.xlu0 %664
        %666 = vrot.lane.b32.xlu0 %v533, 32
        %v667 = vpop.permute.xlu0 %666
        %672 = vrot.lane.b32.xlu0 %v535, 64
        %v673 = vpop.permute.xlu0 %672
        %674 = vrot.lane.b32.xlu0 %v537, 64
        %v675 = vpop.permute.xlu0 %674
        %680 = vrot.lane.b32.xlu0 %v539, 96
        %v681 = vpop.permute.xlu0 %680
        %682 = vrot.lane.b32.xlu0 %v541, 96
        %v683 = vpop.permute.xlu0 %682
        %688 = vrot.lane.b32.xlu0 %v547, 32
        %v689 = vpop.permute.xlu0 %688
        %690 = vrot.lane.b32.xlu0 %v549, 32
        %v691 = vpop.permute.xlu0 %690
        %696 = vrot.lane.b32.xlu0 %v551, 64
        %v697 = vpop.permute.xlu0 %696
        %698 = vrot.lane.b32.xlu0 %v553, 64
        %v699 = vpop.permute.xlu0 %698
        %704 = vrot.lane.b32.xlu0 %v555, 96
        %v705 = vpop.permute.xlu0 %704
        %706 = vrot.lane.b32.xlu0 %v557, 96
        %v707 = vpop.permute.xlu0 %706
        %712 = vrot.lane.b32.xlu0 %v563, 32
        %v713 = vpop.permute.xlu0 %712
        %714 = vrot.lane.b32.xlu0 %v565, 32
        %v715 = vpop.permute.xlu0 %714
        %720 = vrot.lane.b32.xlu0 %v567, 64
        %v721 = vpop.permute.xlu0 %720
        %722 = vrot.lane.b32.xlu0 %v569, 64
        %v723 = vpop.permute.xlu0 %722
        %728 = vrot.lane.b32.xlu0 %v571, 96
        %v729 = vpop.permute.xlu0 %728
        %730 = vrot.lane.b32.xlu0 %v573, 96
        %v731 = vpop.permute.xlu0 %730
        %v734 = vsel %vm496, %v511, %v641
        %v735 = vsel %vm496, %v513, %v643
        %v736 = vsel %vm381, %v734, %v649
        %v737 = vsel %vm381, %v735, %v651
        %vm738 = vcmask 785408
        %v739 = vsel %vm738, %v736, %v657
        %v740 = vsel %vm738, %v737, %v659
        %v741 = vsel %vm496, %v527, %v665
        %v742 = vsel %vm496, %v529, %v667
        %v743 = vsel %vm381, %v741, %v673
        %v744 = vsel %vm381, %v742, %v675
        %v745 = vsel %vm738, %v743, %v681
        %v746 = vsel %vm738, %v744, %v683
        %v747 = vsel %vm496, %v543, %v689
        %v748 = vsel %vm496, %v545, %v691
        %v749 = vsel %vm381, %v747, %v697
        %v750 = vsel %vm381, %v748, %v699
        %v751 = vsel %vm738, %v749, %v705
        %v752 = vsel %vm738, %v750, %v707
        %v753 = vsel %vm496, %v559, %v713
        %v754 = vsel %vm496, %v561, %v715
        %v755 = vsel %vm381, %v753, %v721
        %v756 = vsel %vm381, %v754, %v723
        %v757 = vsel %vm738, %v755, %v729
        %v758 = vsel %vm738, %v756, %v731
        %761 = vrot.lane.b32.xlu0 %v579, 32
        %v762 = vpop.permute.xlu0 %761
        %763 = vrot.lane.b32.xlu0 %v581, 32
        %v764 = vpop.permute.xlu0 %763
        %769 = vrot.lane.b32.xlu0 %v583, 64
        %v770 = vpop.permute.xlu0 %769
        %771 = vrot.lane.b32.xlu0 %v585, 64
        %v772 = vpop.permute.xlu0 %771
        %777 = vrot.lane.b32.xlu0 %v587, 96
        %v778 = vpop.permute.xlu0 %777
        %779 = vrot.lane.b32.xlu0 %v589, 96
        %v780 = vpop.permute.xlu0 %779
        %785 = vrot.lane.b32.xlu0 %v595, 32
        %v786 = vpop.permute.xlu0 %785
        %787 = vrot.lane.b32.xlu0 %v597, 32
        %v788 = vpop.permute.xlu0 %787
        %793 = vrot.lane.b32.xlu0 %v599, 64
        %v794 = vpop.permute.xlu0 %793
        %795 = vrot.lane.b32.xlu0 %v601, 64
        %v796 = vpop.permute.xlu0 %795
        %801 = vrot.lane.b32.xlu0 %v603, 96
        %v802 = vpop.permute.xlu0 %801
        %803 = vrot.lane.b32.xlu0 %v605, 96
        %v804 = vpop.permute.xlu0 %803
        %809 = vrot.lane.b32.xlu0 %v611, 32
        %v810 = vpop.permute.xlu0 %809
        %811 = vrot.lane.b32.xlu0 %v613, 32
        %v812 = vpop.permute.xlu0 %811
        %817 = vrot.lane.b32.xlu0 %v615, 64
        %v818 = vpop.permute.xlu0 %817
        %819 = vrot.lane.b32.xlu0 %v617, 64
        %v820 = vpop.permute.xlu0 %819
        %825 = vrot.lane.b32.xlu0 %v619, 96
        %v826 = vpop.permute.xlu0 %825
        %827 = vrot.lane.b32.xlu0 %v621, 96
        %v828 = vpop.permute.xlu0 %827
        %833 = vrot.lane.b32.xlu0 %v627, 32
        %v834 = vpop.permute.xlu0 %833
        %835 = vrot.lane.b32.xlu0 %v629, 32
        %v836 = vpop.permute.xlu0 %835
        %841 = vrot.lane.b32.xlu0 %v631, 64
        %v842 = vpop.permute.xlu0 %841
        %843 = vrot.lane.b32.xlu0 %v633, 64
        %v844 = vpop.permute.xlu0 %843
        %849 = vrot.lane.b32.xlu0 %v635, 96
        %v850 = vpop.permute.xlu0 %849
        %851 = vrot.lane.b32.xlu0 %v637, 96
        %v852 = vpop.permute.xlu0 %851
        %v855 = vsel %vm496, %v575, %v762
        %v856 = vsel %vm496, %v577, %v764
        %v857 = vsel %vm381, %v855, %v770
        %v858 = vsel %vm381, %v856, %v772
        %v859 = vsel %vm738, %v857, %v778
        %v860 = vsel %vm738, %v858, %v780
        %v861 = vsel %vm496, %v591, %v786
        %v862 = vsel %vm496, %v593, %v788
        %v863 = vsel %vm381, %v861, %v794
        %v864 = vsel %vm381, %v862, %v796
        %v865 = vsel %vm738, %v863, %v802
        %v866 = vsel %vm738, %v864, %v804
        %v867 = vsel %vm496, %v607, %v810
        %v868 = vsel %vm496, %v609, %v812
        %v869 = vsel %vm381, %v867, %v818
        %v870 = vsel %vm381, %v868, %v820
        %v871 = vsel %vm738, %v869, %v826
        %v872 = vsel %vm738, %v870, %v828
        %v873 = vsel %vm496, %v623, %v834
        %v874 = vsel %vm496, %v625, %v836
        %v875 = vsel %vm381, %v873, %v842
        %v876 = vsel %vm381, %v874, %v844
        %v877 = vsel %vm738, %v875, %v850
        %v878 = vsel %vm738, %v876, %v852
        %v879 = vpack.c.bf16 %v740, %v739
        %v880 = vpack.c.bf16 %v746, %v745
        %v881 = vpack.c.bf16 %v752, %v751
        %v882 = vpack.c.bf16 %v758, %v757
        %v883 = vpack.c.bf16 %v860, %v859
        %v884 = vpack.c.bf16 %v866, %v865
        %v885 = vpack.c.bf16 %v872, %v871
        %v886 = vpack.c.bf16 %v878, %v877
        %v887 = vld [vmem:[%s3] sm:$0xf]
        %v888 = vld [vmem:[%s3 + $0x4] sm:$0xf]
        %v889 = vld [vmem:[%s3 + $0x8] sm:$0xf]
        %v890 = vld [vmem:[%s3 + $0xc] sm:$0xf]
        %v891 = vld [vmem:[%s3 + $0x10] sm:$0xf]
        %v892 = vld [vmem:[%s3 + $0x14] sm:$0xf]
        %v893 = vld [vmem:[%s3 + $0x18] sm:$0xf]
        %v894 = vld [vmem:[%s3 + $0x1c] sm:$0xf]
        %v895 = vld [vmem:[%s3 + $0x20] sm:$0xf]
        %v896 = vld [vmem:[%s3 + $0x24] sm:$0xf]
        %v897 = vld [vmem:[%s3 + $0x28] sm:$0xf]
        %v898 = vld [vmem:[%s3 + $0x2c] sm:$0xf]
        %v899 = vld [vmem:[%s3 + $0x30] sm:$0xf]
        %v900 = vld [vmem:[%s3 + $0x34] sm:$0xf]
        %v901 = vld [vmem:[%s3 + $0x38] sm:$0xf]
        %v902 = vld [vmem:[%s3 + $0x3c] sm:$0xf]
        %v903 = vld [vmem:[%s3 + $0x40] sm:$0xf]
        %v904 = vld [vmem:[%s3 + $0x44] sm:$0xf]
        %v905 = vld [vmem:[%s3 + $0x48] sm:$0xf]
        %v906 = vld [vmem:[%s3 + $0x4c] sm:$0xf]
        %v907 = vld [vmem:[%s3 + $0x50] sm:$0xf]
        %v908 = vld [vmem:[%s3 + $0x54] sm:$0xf]
        %v909 = vld [vmem:[%s3 + $0x58] sm:$0xf]
        %v910 = vld [vmem:[%s3 + $0x5c] sm:$0xf]
        %v911 = vld [vmem:[%s3 + $0x60] sm:$0xf]
        %v912 = vld [vmem:[%s3 + $0x64] sm:$0xf]
        %v913 = vld [vmem:[%s3 + $0x68] sm:$0xf]
        %v914 = vld [vmem:[%s3 + $0x6c] sm:$0xf]
        %v915 = vld [vmem:[%s3 + $0x70] sm:$0xf]
        %v916 = vld [vmem:[%s3 + $0x74] sm:$0xf]
        %v917 = vld [vmem:[%s3 + $0x78] sm:$0xf]
        %v918 = vld [vmem:[%s3 + $0x7c] sm:$0xf]
        %v919 = vld [vmem:[%s3 + $0x80] sm:$0xf]
        %v920 = vld [vmem:[%s3 + $0x84] sm:$0xf]
        %v921 = vld [vmem:[%s3 + $0x88] sm:$0xf]
        %v922 = vld [vmem:[%s3 + $0x8c] sm:$0xf]
        %v923 = vld [vmem:[%s3 + $0x90] sm:$0xf]
        %v924 = vld [vmem:[%s3 + $0x94] sm:$0xf]
        %v925 = vld [vmem:[%s3 + $0x98] sm:$0xf]
        %v926 = vld [vmem:[%s3 + $0x9c] sm:$0xf]
        %v927 = vld [vmem:[%s3 + $0xa0] sm:$0xf]
        %v928 = vld [vmem:[%s3 + $0xa4] sm:$0xf]
        %v929 = vld [vmem:[%s3 + $0xa8] sm:$0xf]
        %v930 = vld [vmem:[%s3 + $0xac] sm:$0xf]
        %v931 = vld [vmem:[%s3 + $0xb0] sm:$0xf]
        %v932 = vld [vmem:[%s3 + $0xb4] sm:$0xf]
        %v933 = vld [vmem:[%s3 + $0xb8] sm:$0xf]
        %v934 = vld [vmem:[%s3 + $0xbc] sm:$0xf]
        %v935 = vld [vmem:[%s3 + $0xc0] sm:$0xf]
        %v936 = vld [vmem:[%s3 + $0xc4] sm:$0xf]
        %v937 = vld [vmem:[%s3 + $0xc8] sm:$0xf]
        %v938 = vld [vmem:[%s3 + $0xcc] sm:$0xf]
        %v939 = vld [vmem:[%s3 + $0xd0] sm:$0xf]
        %v940 = vld [vmem:[%s3 + $0xd4] sm:$0xf]
        %v941 = vld [vmem:[%s3 + $0xd8] sm:$0xf]
        %v942 = vld [vmem:[%s3 + $0xdc] sm:$0xf]
        %v943 = vld [vmem:[%s3 + $0xe0] sm:$0xf]
        %v944 = vld [vmem:[%s3 + $0xe4] sm:$0xf]
        %v945 = vld [vmem:[%s3 + $0xe8] sm:$0xf]
        %v946 = vld [vmem:[%s3 + $0xec] sm:$0xf]
        %v947 = vld [vmem:[%s3 + $0xf0] sm:$0xf]
        %v948 = vld [vmem:[%s3 + $0xf4] sm:$0xf]
        %v949 = vld [vmem:[%s3 + $0xf8] sm:$0xf]
        %v950 = vld [vmem:[%s3 + $0xfc] sm:$0xf]
        %v951 = vld [vmem:[%s3 + $0x100] sm:$0xf]
        %v952 = vld [vmem:[%s3 + $0x104] sm:$0xf]
        %v953 = vld [vmem:[%s3 + $0x108] sm:$0xf]
        %v954 = vld [vmem:[%s3 + $0x10c] sm:$0xf]
        %v955 = vld [vmem:[%s3 + $0x110] sm:$0xf]
        %v956 = vld [vmem:[%s3 + $0x114] sm:$0xf]
        %v957 = vld [vmem:[%s3 + $0x118] sm:$0xf]
        %v958 = vld [vmem:[%s3 + $0x11c] sm:$0xf]
        %v959 = vld [vmem:[%s3 + $0x120] sm:$0xf]
        %v960 = vld [vmem:[%s3 + $0x124] sm:$0xf]
        %v961 = vld [vmem:[%s3 + $0x128] sm:$0xf]
        %v962 = vld [vmem:[%s3 + $0x12c] sm:$0xf]
        %v963 = vld [vmem:[%s3 + $0x130] sm:$0xf]
        %v964 = vld [vmem:[%s3 + $0x134] sm:$0xf]
        %v965 = vld [vmem:[%s3 + $0x138] sm:$0xf]
        %v966 = vld [vmem:[%s3 + $0x13c] sm:$0xf]
        %v967 = vld [vmem:[%s3 + $0x140] sm:$0xf]
        %v968 = vld [vmem:[%s3 + $0x144] sm:$0xf]
        %v969 = vld [vmem:[%s3 + $0x148] sm:$0xf]
        %v970 = vld [vmem:[%s3 + $0x14c] sm:$0xf]
        %v971 = vld [vmem:[%s3 + $0x150] sm:$0xf]
        %v972 = vld [vmem:[%s3 + $0x154] sm:$0xf]
        %v973 = vld [vmem:[%s3 + $0x158] sm:$0xf]
        %v974 = vld [vmem:[%s3 + $0x15c] sm:$0xf]
        %v975 = vld [vmem:[%s3 + $0x160] sm:$0xf]
        %v976 = vld [vmem:[%s3 + $0x164] sm:$0xf]
        %v977 = vld [vmem:[%s3 + $0x168] sm:$0xf]
        %v978 = vld [vmem:[%s3 + $0x16c] sm:$0xf]
        %v979 = vld [vmem:[%s3 + $0x170] sm:$0xf]
        %v980 = vld [vmem:[%s3 + $0x174] sm:$0xf]
        %v981 = vld [vmem:[%s3 + $0x178] sm:$0xf]
        %v982 = vld [vmem:[%s3 + $0x17c] sm:$0xf]
        %v983 = vld [vmem:[%s3 + $0x180] sm:$0xf]
        %v984 = vld [vmem:[%s3 + $0x184] sm:$0xf]
        %v985 = vld [vmem:[%s3 + $0x188] sm:$0xf]
        %v986 = vld [vmem:[%s3 + $0x18c] sm:$0xf]
        %v987 = vld [vmem:[%s3 + $0x190] sm:$0xf]
        %v988 = vld [vmem:[%s3 + $0x194] sm:$0xf]
        %v989 = vld [vmem:[%s3 + $0x198] sm:$0xf]
        %v990 = vld [vmem:[%s3 + $0x19c] sm:$0xf]
        %v991 = vld [vmem:[%s3 + $0x1a0] sm:$0xf]
        %v992 = vld [vmem:[%s3 + $0x1a4] sm:$0xf]
        %v993 = vld [vmem:[%s3 + $0x1a8] sm:$0xf]
        %v994 = vld [vmem:[%s3 + $0x1ac] sm:$0xf]
        %v995 = vld [vmem:[%s3 + $0x1b0] sm:$0xf]
        %v996 = vld [vmem:[%s3 + $0x1b4] sm:$0xf]
        %v997 = vld [vmem:[%s3 + $0x1b8] sm:$0xf]
        %v998 = vld [vmem:[%s3 + $0x1bc] sm:$0xf]
        %v999 = vld [vmem:[%s3 + $0x1c0] sm:$0xf]
        %v1000 = vld [vmem:[%s3 + $0x1c4] sm:$0xf]
        %v1001 = vld [vmem:[%s3 + $0x1c8] sm:$0xf]
        %v1002 = vld [vmem:[%s3 + $0x1cc] sm:$0xf]
        %v1003 = vld [vmem:[%s3 + $0x1d0] sm:$0xf]
        %v1004 = vld [vmem:[%s3 + $0x1d4] sm:$0xf]
        %v1005 = vld [vmem:[%s3 + $0x1d8] sm:$0xf]
        %v1006 = vld [vmem:[%s3 + $0x1dc] sm:$0xf]
        %v1007 = vld [vmem:[%s3 + $0x1e0] sm:$0xf]
        %v1008 = vld [vmem:[%s3 + $0x1e4] sm:$0xf]
        %v1009 = vld [vmem:[%s3 + $0x1e8] sm:$0xf]
        %v1010 = vld [vmem:[%s3 + $0x1ec] sm:$0xf]
        %v1011 = vld [vmem:[%s3 + $0x1f0] sm:$0xf]
        %v1012 = vld [vmem:[%s3 + $0x1f4] sm:$0xf]
        %v1013 = vld [vmem:[%s3 + $0x1f8] sm:$0xf]
        %v1014 = vld [vmem:[%s3 + $0x1fc] sm:$0xf]
        %v1015 = vld [vmem:[%s4] sm:$0x1]
        %v1017 = vlaneseq
        %v1018 = vshrl.u32 %v1017, 7
        %v1019 = vsub.s32 0, %v1018
        %v1020 = vrot.slane %v1015, %v1019
        %v1150 = vunpack.c.l.b16 %v887
        %v1151 = vunpack.c.l.b16 %v888
        %v1152 = vunpack.c.l.b16 %v889
        %v1153 = vunpack.c.l.b16 %v890
        %v1154 = vunpack.c.l.b16 %v891
        %v1155 = vunpack.c.l.b16 %v892
        %v1156 = vunpack.c.l.b16 %v893
        %v1157 = vunpack.c.l.b16 %v894
        %v1158 = vunpack.c.l.b16 %v895
        %v1159 = vunpack.c.l.b16 %v896
        %v1160 = vunpack.c.l.b16 %v897
        %v1161 = vunpack.c.l.b16 %v898
        %v1162 = vunpack.c.l.b16 %v899
        %v1163 = vunpack.c.l.b16 %v900
        %v1164 = vunpack.c.l.b16 %v901
        %v1165 = vunpack.c.l.b16 %v902
        %v1166 = vunpack.c.l.b16 %v903
        %v1167 = vunpack.c.l.b16 %v904
        %v1168 = vunpack.c.l.b16 %v905
        %v1169 = vunpack.c.l.b16 %v906
        %v1170 = vunpack.c.l.b16 %v907
        %v1171 = vunpack.c.l.b16 %v908
        %v1172 = vunpack.c.l.b16 %v909
        %v1173 = vunpack.c.l.b16 %v910
        %v1174 = vunpack.c.l.b16 %v911
        %v1175 = vunpack.c.l.b16 %v912
        %v1176 = vunpack.c.l.b16 %v913
        %v1177 = vunpack.c.l.b16 %v914
        %v1178 = vunpack.c.l.b16 %v915
        %v1179 = vunpack.c.l.b16 %v916
        %v1180 = vunpack.c.l.b16 %v917
        %v1181 = vunpack.c.l.b16 %v918
        %v1182 = vunpack.c.l.b16 %v919
        %v1183 = vunpack.c.l.b16 %v920
        %v1184 = vunpack.c.l.b16 %v921
        %v1185 = vunpack.c.l.b16 %v922
        %v1186 = vunpack.c.l.b16 %v923
        %v1187 = vunpack.c.l.b16 %v924
        %v1188 = vunpack.c.l.b16 %v925
        %v1189 = vunpack.c.l.b16 %v926
        %v1190 = vunpack.c.l.b16 %v927
        %v1191 = vunpack.c.l.b16 %v928
        %v1192 = vunpack.c.l.b16 %v929
        %v1193 = vunpack.c.l.b16 %v930
        %v1194 = vunpack.c.l.b16 %v931
        %v1195 = vunpack.c.l.b16 %v932
        %v1196 = vunpack.c.l.b16 %v933
        %v1197 = vunpack.c.l.b16 %v934
        %v1198 = vunpack.c.l.b16 %v935
        %v1199 = vunpack.c.l.b16 %v936
        %v1200 = vunpack.c.l.b16 %v937
        %v1201 = vunpack.c.l.b16 %v938
        %v1202 = vunpack.c.l.b16 %v939
        %v1203 = vunpack.c.l.b16 %v940
        %v1204 = vunpack.c.l.b16 %v941
        %v1205 = vunpack.c.l.b16 %v942
        %v1206 = vunpack.c.l.b16 %v943
        %v1207 = vunpack.c.l.b16 %v944
        %v1208 = vunpack.c.l.b16 %v945
        %v1209 = vunpack.c.l.b16 %v946
        %v1210 = vunpack.c.l.b16 %v947
        %v1211 = vunpack.c.l.b16 %v948
        %v1212 = vunpack.c.l.b16 %v949
        %v1213 = vunpack.c.l.b16 %v950
        %v1214 = vunpack.c.l.b16 %v951
        %v1215 = vunpack.c.l.b16 %v952
        %v1216 = vunpack.c.l.b16 %v953
        %v1217 = vunpack.c.l.b16 %v954
        %v1218 = vunpack.c.l.b16 %v955
        %v1219 = vunpack.c.l.b16 %v956
        %v1220 = vunpack.c.l.b16 %v957
        %v1221 = vunpack.c.l.b16 %v958
        %v1222 = vunpack.c.l.b16 %v959
        %v1223 = vunpack.c.l.b16 %v960
        %v1224 = vunpack.c.l.b16 %v961
        %v1225 = vunpack.c.l.b16 %v962
        %v1226 = vunpack.c.l.b16 %v963
        %v1227 = vunpack.c.l.b16 %v964
        %v1228 = vunpack.c.l.b16 %v965
        %v1229 = vunpack.c.l.b16 %v966
        %v1230 = vunpack.c.l.b16 %v967
        %v1231 = vunpack.c.l.b16 %v968
        %v1232 = vunpack.c.l.b16 %v969
        %v1233 = vunpack.c.l.b16 %v970
        %v1234 = vunpack.c.l.b16 %v971
        %v1235 = vunpack.c.l.b16 %v972
        %v1236 = vunpack.c.l.b16 %v973
        %v1237 = vunpack.c.l.b16 %v974
        %v1238 = vunpack.c.l.b16 %v975
        %v1239 = vunpack.c.l.b16 %v976
        %v1240 = vunpack.c.l.b16 %v977
        %v1241 = vunpack.c.l.b16 %v978
        %v1242 = vunpack.c.l.b16 %v979
        %v1243 = vunpack.c.l.b16 %v980
        %v1244 = vunpack.c.l.b16 %v981
        %v1245 = vunpack.c.l.b16 %v982
        %v1246 = vunpack.c.l.b16 %v983
        %v1247 = vunpack.c.l.b16 %v984
        %v1248 = vunpack.c.l.b16 %v985
        %v1249 = vunpack.c.l.b16 %v986
        %v1250 = vunpack.c.l.b16 %v987
        %v1251 = vunpack.c.l.b16 %v988
        %v1252 = vunpack.c.l.b16 %v989
        %v1253 = vunpack.c.l.b16 %v990
        %v1254 = vunpack.c.l.b16 %v991
        %v1255 = vunpack.c.l.b16 %v992
        %v1256 = vunpack.c.l.b16 %v993
        %v1257 = vunpack.c.l.b16 %v994
        %v1258 = vunpack.c.l.b16 %v995
        %v1259 = vunpack.c.l.b16 %v996
        %v1260 = vunpack.c.l.b16 %v997
        %v1261 = vunpack.c.l.b16 %v998
        %v1262 = vunpack.c.l.b16 %v999
        %v1263 = vunpack.c.l.b16 %v1000
        %v1264 = vunpack.c.l.b16 %v1001
        %v1265 = vunpack.c.l.b16 %v1002
        %v1266 = vunpack.c.l.b16 %v1003
        %v1267 = vunpack.c.l.b16 %v1004
        %v1268 = vunpack.c.l.b16 %v1005
        %v1269 = vunpack.c.l.b16 %v1006
        %v1270 = vunpack.c.l.b16 %v1007
        %v1271 = vunpack.c.l.b16 %v1008
        %v1272 = vunpack.c.l.b16 %v1009
        %v1273 = vunpack.c.l.b16 %v1010
        %v1274 = vunpack.c.l.b16 %v1011
        %v1275 = vunpack.c.l.b16 %v1012
        %v1276 = vunpack.c.l.b16 %v1013
        %v1277 = vunpack.c.l.b16 %v1014
        %v1278 = vpack.c.b16 %v1151, %v1150
        %v1279 = vpack.c.b16 %v1153, %v1152
        %v1280 = vpack.c.b16 %v1155, %v1154
        %v1281 = vpack.c.b16 %v1157, %v1156
        %v1282 = vpack.c.b16 %v1159, %v1158
        %v1283 = vpack.c.b16 %v1161, %v1160
        %v1284 = vpack.c.b16 %v1163, %v1162
        %v1285 = vpack.c.b16 %v1165, %v1164
        %v1286 = vpack.c.b16 %v1167, %v1166
        %v1287 = vpack.c.b16 %v1169, %v1168
        %v1288 = vpack.c.b16 %v1171, %v1170
        %v1289 = vpack.c.b16 %v1173, %v1172
        %v1290 = vpack.c.b16 %v1175, %v1174
        %v1291 = vpack.c.b16 %v1177, %v1176
        %v1292 = vpack.c.b16 %v1179, %v1178
        %v1293 = vpack.c.b16 %v1181, %v1180
        %v1294 = vpack.c.b16 %v1183, %v1182
        %v1295 = vpack.c.b16 %v1185, %v1184
        %v1296 = vpack.c.b16 %v1187, %v1186
        %v1297 = vpack.c.b16 %v1189, %v1188
        %v1298 = vpack.c.b16 %v1191, %v1190
        %v1299 = vpack.c.b16 %v1193, %v1192
        %v1300 = vpack.c.b16 %v1195, %v1194
        %v1301 = vpack.c.b16 %v1197, %v1196
        %v1302 = vpack.c.b16 %v1199, %v1198
        %v1303 = vpack.c.b16 %v1201, %v1200
        %v1304 = vpack.c.b16 %v1203, %v1202
        %v1305 = vpack.c.b16 %v1205, %v1204
        %v1306 = vpack.c.b16 %v1207, %v1206
        %v1307 = vpack.c.b16 %v1209, %v1208
        %v1308 = vpack.c.b16 %v1211, %v1210
        %v1309 = vpack.c.b16 %v1213, %v1212
        %v1310 = vpack.c.b16 %v1215, %v1214
        %v1311 = vpack.c.b16 %v1217, %v1216
        %v1312 = vpack.c.b16 %v1219, %v1218
        %v1313 = vpack.c.b16 %v1221, %v1220
        %v1314 = vpack.c.b16 %v1223, %v1222
        %v1315 = vpack.c.b16 %v1225, %v1224
        %v1316 = vpack.c.b16 %v1227, %v1226
        %v1317 = vpack.c.b16 %v1229, %v1228
        %v1318 = vpack.c.b16 %v1231, %v1230
        %v1319 = vpack.c.b16 %v1233, %v1232
        %v1320 = vpack.c.b16 %v1235, %v1234
        %v1321 = vpack.c.b16 %v1237, %v1236
        %v1322 = vpack.c.b16 %v1239, %v1238
        %v1323 = vpack.c.b16 %v1241, %v1240
        %v1324 = vpack.c.b16 %v1243, %v1242
        %v1325 = vpack.c.b16 %v1245, %v1244
        %v1326 = vpack.c.b16 %v1247, %v1246
        %v1327 = vpack.c.b16 %v1249, %v1248
        %v1328 = vpack.c.b16 %v1251, %v1250
        %v1329 = vpack.c.b16 %v1253, %v1252
        %v1330 = vpack.c.b16 %v1255, %v1254
        %v1331 = vpack.c.b16 %v1257, %v1256
        %v1332 = vpack.c.b16 %v1259, %v1258
        %v1333 = vpack.c.b16 %v1261, %v1260
        %v1334 = vpack.c.b16 %v1263, %v1262
        %v1335 = vpack.c.b16 %v1265, %v1264
        %v1336 = vpack.c.b16 %v1267, %v1266
        %v1337 = vpack.c.b16 %v1269, %v1268
        %v1338 = vpack.c.b16 %v1271, %v1270
        %v1339 = vpack.c.b16 %v1273, %v1272
        %v1340 = vpack.c.b16 %v1275, %v1274
        %v1341 = vpack.c.b16 %v1277, %v1276
        %1406 = vmatprep.subr.bf16.mxu0 0
        %1407 = vmatpush1.bf16.msra.mxu0 %v1285
        %1408 = vmatprep.subr.bf16.mxu0 0
        %1409 = vmatpush1.bf16.msra.mxu0 %v1284
        %1410 = vmatprep.subr.bf16.mxu0 0
        %1411 = vmatpush1.bf16.msra.mxu0 %v1283
        %1412 = vmatprep.subr.bf16.mxu0 0
        %1413 = vmatpush1.bf16.msra.mxu0 %v1282
        %1414 = vmatprep.subr.bf16.mxu0 0
        %1415 = vmatpush1.bf16.msra.mxu0 %v1281
        %1416 = vmatprep.subr.bf16.mxu0 0
        %1417 = vmatpush1.bf16.msra.mxu0 %v1280
        %1418 = vmatprep.subr.bf16.mxu0 0
        %1419 = vmatpush1.bf16.msra.mxu0 %v1279
        %1420 = vmatprep.subr.bf16.mxu0 0
        %1421 = vmatpush1.bf16.msra.mxu0 %v1278
        %1422 = vmatprep.subr.bf16.mxu0 0
        %1423 = vmatpush2.bf16.msra.mxu0 %v1293
        %1424 = vmatprep.subr.bf16.mxu0 0
        %1425 = vmatpush2.bf16.msra.mxu0 %v1292
        %1426 = vmatprep.subr.bf16.mxu0 0
        %1427 = vmatpush2.bf16.msra.mxu0 %v1291
        %1428 = vmatprep.subr.bf16.mxu0 0
        %1429 = vmatpush2.bf16.msra.mxu0 %v1290
        %1430 = vmatprep.subr.bf16.mxu0 0
        %1431 = vmatpush2.bf16.msra.mxu0 %v1289
        %1432 = vmatprep.subr.bf16.mxu0 0
        %1433 = vmatpush2.bf16.msra.mxu0 %v1288
        %1434 = vmatprep.subr.bf16.mxu0 0
        %1435 = vmatpush2.bf16.msra.mxu0 %v1287
        %1436 = vmatprep.subr.bf16.mxu0 0
        %1437 = vmatpush2.bf16.msra.mxu0 %v1286
        %1438 = vmatprep.mubr.bf16.mxu0 %v880
        %1439 = vmatmul.mubr.bf16.gmra.mxu0 %v879
        %v1440 = vpop.f32.mrf.mxu0
        %v1441 = vadd.f32 %v1020, %v1440
        %v1442 = vpop.f32.mrf.mxu0
        %v1443 = vpop.f32.mrf.mxu0
        %v1444 = vadd.f32 %v1020, %v1443
        %v1445 = vpop.f32.mrf.mxu0
        %1446 = vdwg.mxu0
        %1447 = vmatprep.subr.bf16.mxu0 0
        %1448 = vmatpush1.bf16.msra.mxu0 %v1301
        %1449 = vmatprep.subr.bf16.mxu0 0
        %1450 = vmatpush1.bf16.msra.mxu0 %v1300
        %1451 = vmatprep.subr.bf16.mxu0 0
        %1452 = vmatpush1.bf16.msra.mxu0 %v1299
        %1453 = vmatprep.subr.bf16.mxu0 0
        %1454 = vmatpush1.bf16.msra.mxu0 %v1298
        %1455 = vmatprep.subr.bf16.mxu0 0
        %1456 = vmatpush1.bf16.msra.mxu0 %v1297
        %1457 = vmatprep.subr.bf16.mxu0 0
        %1458 = vmatpush1.bf16.msra.mxu0 %v1296
        %1459 = vmatprep.subr.bf16.mxu0 0
        %1460 = vmatpush1.bf16.msra.mxu0 %v1295
        %1461 = vmatprep.subr.bf16.mxu0 0
        %1462 = vmatpush1.bf16.msra.mxu0 %v1294
        %1463 = vmatprep.subr.bf16.mxu0 0
        %1464 = vmatpush2.bf16.msra.mxu0 %v1309
        %1465 = vmatprep.subr.bf16.mxu0 0
        %1466 = vmatpush2.bf16.msra.mxu0 %v1308
        %1467 = vmatprep.subr.bf16.mxu0 0
        %1468 = vmatpush2.bf16.msra.mxu0 %v1307
        %1469 = vmatprep.subr.bf16.mxu0 0
        %1470 = vmatpush2.bf16.msra.mxu0 %v1306
        %1471 = vmatprep.subr.bf16.mxu0 0
        %1472 = vmatpush2.bf16.msra.mxu0 %v1305
        %1473 = vmatprep.subr.bf16.mxu0 0
        %1474 = vmatpush2.bf16.msra.mxu0 %v1304
        %1475 = vmatprep.subr.bf16.mxu0 0
        %1476 = vmatpush2.bf16.msra.mxu0 %v1303
        %1477 = vmatprep.subr.bf16.mxu0 0
        %1478 = vmatpush2.bf16.msra.mxu0 %v1302
        %1479 = vmatprep.mubr.bf16.mxu0 %v882
        %1480 = vmatmul.mubr.bf16.gmra.mxu0 %v881
        %v1481 = vpop.f32.mrf.mxu0
        %v1482 = vadd.f32 %v1441, %v1481
        %v1483 = vpop.f32.mrf.mxu0
        %v1484 = vpop.f32.mrf.mxu0
        %v1485 = vadd.f32 %v1444, %v1484
        %v1486 = vpop.f32.mrf.mxu0
        %1487 = vdwg.mxu0
        %1488 = vmatprep.subr.bf16.mxu0 0
        %1489 = vmatpush1.bf16.msra.mxu0 %v1317
        %1490 = vmatprep.subr.bf16.mxu0 0
        %1491 = vmatpush1.bf16.msra.mxu0 %v1316
        %1492 = vmatprep.subr.bf16.mxu0 0
        %1493 = vmatpush1.bf16.msra.mxu0 %v1315
        %1494 = vmatprep.subr.bf16.mxu0 0
        %1495 = vmatpush1.bf16.msra.mxu0 %v1314
        %1496 = vmatprep.subr.bf16.mxu0 0
        %1497 = vmatpush1.bf16.msra.mxu0 %v1313
        %1498 = vmatprep.subr.bf16.mxu0 0
        %1499 = vmatpush1.bf16.msra.mxu0 %v1312
        %1500 = vmatprep.subr.bf16.mxu0 0
        %1501 = vmatpush1.bf16.msra.mxu0 %v1311
        %1502 = vmatprep.subr.bf16.mxu0 0
        %1503 = vmatpush1.bf16.msra.mxu0 %v1310
        %1504 = vmatprep.subr.bf16.mxu0 0
        %1505 = vmatpush2.bf16.msra.mxu0 %v1325
        %1506 = vmatprep.subr.bf16.mxu0 0
        %1507 = vmatpush2.bf16.msra.mxu0 %v1324
        %1508 = vmatprep.subr.bf16.mxu0 0
        %1509 = vmatpush2.bf16.msra.mxu0 %v1323
        %1510 = vmatprep.subr.bf16.mxu0 0
        %1511 = vmatpush2.bf16.msra.mxu0 %v1322
        %1512 = vmatprep.subr.bf16.mxu0 0
        %1513 = vmatpush2.bf16.msra.mxu0 %v1321
        %1514 = vmatprep.subr.bf16.mxu0 0
        %1515 = vmatpush2.bf16.msra.mxu0 %v1320
        %1516 = vmatprep.subr.bf16.mxu0 0
        %1517 = vmatpush2.bf16.msra.mxu0 %v1319
        %1518 = vmatprep.subr.bf16.mxu0 0
        %1519 = vmatpush2.bf16.msra.mxu0 %v1318
        %1520 = vmatprep.mubr.bf16.mxu0 %v884
        %1521 = vmatmul.mubr.bf16.gmra.mxu0 %v883
        %v1522 = vpop.f32.mrf.mxu0
        %v1523 = vadd.f32 %v1482, %v1522
        %v1524 = vpop.f32.mrf.mxu0
        %v1525 = vpop.f32.mrf.mxu0
        %v1526 = vadd.f32 %v1485, %v1525
        %v1527 = vpop.f32.mrf.mxu0
        %1528 = vdwg.mxu0
        %1529 = vmatprep.subr.bf16.mxu0 0
        %1530 = vmatpush1.bf16.msra.mxu0 %v1333
        %1531 = vmatprep.subr.bf16.mxu0 0
        %1532 = vmatpush1.bf16.msra.mxu0 %v1332
        %1533 = vmatprep.subr.bf16.mxu0 0
        %1534 = vmatpush1.bf16.msra.mxu0 %v1331
        %1535 = vmatprep.subr.bf16.mxu0 0
        %1536 = vmatpush1.bf16.msra.mxu0 %v1330
        %1537 = vmatprep.subr.bf16.mxu0 0
        %1538 = vmatpush1.bf16.msra.mxu0 %v1329
        %1539 = vmatprep.subr.bf16.mxu0 0
        %1540 = vmatpush1.bf16.msra.mxu0 %v1328
        %1541 = vmatprep.subr.bf16.mxu0 0
        %1542 = vmatpush1.bf16.msra.mxu0 %v1327
        %1543 = vmatprep.subr.bf16.mxu0 0
        %1544 = vmatpush1.bf16.msra.mxu0 %v1326
        %1545 = vmatprep.subr.bf16.mxu0 0
        %1546 = vmatpush2.bf16.msra.mxu0 %v1341
        %1547 = vmatprep.subr.bf16.mxu0 0
        %1548 = vmatpush2.bf16.msra.mxu0 %v1340
        %1549 = vmatprep.subr.bf16.mxu0 0
        %1550 = vmatpush2.bf16.msra.mxu0 %v1339
        %1551 = vmatprep.subr.bf16.mxu0 0
        %1552 = vmatpush2.bf16.msra.mxu0 %v1338
        %1553 = vmatprep.subr.bf16.mxu0 0
        %1554 = vmatpush2.bf16.msra.mxu0 %v1337
        %1555 = vmatprep.subr.bf16.mxu0 0
        %1556 = vmatpush2.bf16.msra.mxu0 %v1336
        %1557 = vmatprep.subr.bf16.mxu0 0
        %1558 = vmatpush2.bf16.msra.mxu0 %v1335
        %1559 = vmatprep.subr.bf16.mxu0 0
        %1560 = vmatpush2.bf16.msra.mxu0 %v1334
        %1561 = vmatprep.mubr.bf16.mxu0 %v886
        %1562 = vmatmul.mubr.bf16.gmra.mxu0 %v885
        %v1563 = vpop.f32.mrf.mxu0
        %v1564 = vadd.f32 %v1523, %v1563
        %v1565 = vpop.f32.mrf.mxu0
        %v1566 = vpop.f32.mrf.mxu0
        %v1567 = vadd.f32 %v1526, %v1566
        %v1568 = vpop.f32.mrf.mxu0
        %1569 = vdwg.mxu0
        %v1570 = vmax.f32 %v1564, 0.0
        %v1571 = vmax.f32 %v1567, 0.0
        %vm1572 = vcmp.ne.f32.partialorder %v1564, %v1564
        %vm1573 = vcmp.ne.f32.partialorder %v1567, %v1567
        %v1574 = vadd.f32 %v1564, 0.0
        %v1575 = vadd.f32 %v1567, 0.0
        %v1576 = vand.u32 2147483647, %v1564
        %v1577 = vand.u32 2147483647, %v1567
        %v1578 = vsub.f32 0.0, %v1576
        %v1579 = vsub.f32 0.0, %v1577
        %v1580 = vmul.f32 %v1578, 1.442695
        %v1581 = vpow.pop %v1580
        %v1582 = vmul.f32 %v1579, 1.442695
        %v1583 = vpow.pop %v1582
        %v1584 = vadd.f32 %v1581, 1.0
        %v1585 = vlog2.pop %v1584
        %v1586 = vmul.f32 %v1585, 0.6931472
        %v1587 = vmul.f32 -0.5, %v1581
        %v1588 = vadd.f32 %v1587, 1.0
        %v1589 = vmul.f32 %v1588, %v1581
        %v1590 = vand.u32 2147483647, %v1581
        %vm1591 = vcmp.lt.f32.partialorder %v1590, 0.0004427343
        %v1592 = vsel %vm1591, %v1589, %v1586
        %v1593 = vadd.f32 %v1583, 1.0
        %v1594 = vlog2.pop %v1593
        %v1595 = vmul.f32 %v1594, 0.6931472
        %v1596 = vmul.f32 -0.5, %v1583
        %v1597 = vadd.f32 %v1596, 1.0
        %v1598 = vmul.f32 %v1597, %v1583
        %v1599 = vand.u32 2147483647, %v1583
        %vm1600 = vcmp.lt.f32.partialorder %v1599, 0.0004427343
        %v1601 = vsel %vm1600, %v1598, %v1595
        %v1602 = vadd.f32 %v1570, %v1592
        %v1603 = vadd.f32 %v1571, %v1601
        %v1604 = vsel %vm1572, %v1574, %v1602
        %v1605 = vsel %vm1573, %v1575, %v1603
        %v1606 = vtanh.pop %v1604
        %v1607 = vtanh.pop %v1605
        %v1608 = vmul.f32 %v1564, %v1606
        %v1609 = vmul.f32 %v1567, %v1607
        %1610 = vst.msk [vmem:[#allocation3] sm:$0xff] %vm381, 0.0
        %1611 = vst.msk [vmem:[#allocation3 + $0x8] sm:$0xff] %vm381, 0.0
        %1612 = vst.msk [vmem:[#allocation3 + $0x10] sm:$0xff] %vm381, 0.0
        %1613 = vst.msk [vmem:[#allocation3 + $0x18] sm:$0xff] %vm381, 0.0
        %1614 = vst.msk [vmem:[#allocation3 + $0x20] sm:$0xff] %vm381, 0.0
        %1615 = vst.msk [vmem:[#allocation3 + $0x28] sm:$0xff] %vm381, 0.0
        %1616 = vst.msk [vmem:[#allocation3 + $0x30] sm:$0xff] %vm381, 0.0
        %1617 = vst.msk [vmem:[#allocation3 + $0x38] sm:$0xff] %vm381, 0.0
        %1618 = vst.msk [vmem:[#allocation3 + $0x40] sm:$0xff] %vm381, 0.0
        %1619 = vst.msk [vmem:[#allocation3 + $0x48] sm:$0xff] %vm381, 0.0
        %1620 = vst.msk [vmem:[#allocation3 + $0x1e] sm:$0xff] %vm381, %v1608
        %vm1621 = vcmask 520192
        %1622 = vst.msk [vmem:[#allocation3 + $0x26] sm:$0x1f] %vm1621, %v1609
        %v1623 = vld [vmem:[#allocation3] sm:$0xff]
        %v1624 = vld [vmem:[#allocation3 + $0x8] sm:$0xff]
        %v1625 = vld [vmem:[#allocation3 + $0x10] sm:$0xff]
        %v1626 = vld [vmem:[#allocation3 + $0x18] sm:$0xff]
        %v1627 = vld [vmem:[#allocation3 + $0x20] sm:$0xff]
        %v1628 = vld [vmem:[#allocation3 + $0x28] sm:$0x7]
        %v1629 = vld [vmem:[#allocation3 + $0x2] sm:$0xff]
        %v1630 = vld [vmem:[#allocation3 + $0xa] sm:$0xff]
        %v1631 = vld [vmem:[#allocation3 + $0x12] sm:$0xff]
        %v1632 = vld [vmem:[#allocation3 + $0x1a] sm:$0xff]
        %v1633 = vld [vmem:[#allocation3 + $0x22] sm:$0xff]
        %v1634 = vld [vmem:[#allocation3 + $0x2a] sm:$0x7]
        %v1635 = vld [vmem:[#allocation3 + $0x4] sm:$0xff]
        %v1636 = vld [vmem:[#allocation3 + $0xc] sm:$0xff]
        %v1637 = vld [vmem:[#allocation3 + $0x14] sm:$0xff]
        %v1638 = vld [vmem:[#allocation3 + $0x1c] sm:$0xff]
        %v1639 = vld [vmem:[#allocation3 + $0x24] sm:$0xff]
        %v1640 = vld [vmem:[#allocation3 + $0x2c] sm:$0x7]
        %v1641 = vld [vmem:[#allocation3 + $0x6] sm:$0xff]
        %v1642 = vld [vmem:[#allocation3 + $0xe] sm:$0xff]
        %v1643 = vld [vmem:[#allocation3 + $0x16] sm:$0xff]
        %v1644 = vld [vmem:[#allocation3 + $0x1e] sm:$0xff]
        %v1645 = vld [vmem:[#allocation3 + $0x26] sm:$0xff]
        %v1646 = vld [vmem:[#allocation3 + $0x2e] sm:$0x7]
        %v1647 = vld [vmem:[#allocation3 + $0x28] sm:$0xff]
        %v1648 = vld [vmem:[#allocation3 + $0x30] sm:$0x7]
        %v1649 = vld [vmem:[#allocation3 + $0x2a] sm:$0xff]
        %v1650 = vld [vmem:[#allocation3 + $0x32] sm:$0x7]
        %v1651 = vld [vmem:[#allocation3 + $0x2c] sm:$0xff]
        %v1652 = vld [vmem:[#allocation3 + $0x34] sm:$0x7]
        %v1653 = vld [vmem:[#allocation3 + $0x2e] sm:$0xff]
        %v1654 = vld [vmem:[#allocation3 + $0x36] sm:$0x7]
        %v1655 = vld [vmem:[#allocation3 + $0x30] sm:$0xff]
        %v1656 = vld [vmem:[#allocation3 + $0x38] sm:$0x7]
        %v1657 = vld [vmem:[#allocation3 + $0x32] sm:$0xff]
        %v1658 = vld [vmem:[#allocation3 + $0x3a] sm:$0x7]
        %v1659 = vld [vmem:[#allocation3 + $0x34] sm:$0xff]
        %v1660 = vld [vmem:[#allocation3 + $0x3c] sm:$0x7]
        %v1661 = vld [vmem:[#allocation3 + $0x36] sm:$0xff]
        %v1662 = vld [vmem:[#allocation3 + $0x3e] sm:$0x7]
        %v1663 = vld [vmem:[#allocation3 + $0x38] sm:$0xff]
        %v1664 = vld [vmem:[#allocation3 + $0x40] sm:$0x7]
        %v1665 = vld [vmem:[#allocation3 + $0x3a] sm:$0xff]
        %v1666 = vld [vmem:[#allocation3 + $0x42] sm:$0x7]
        %v1667 = vld [vmem:[#allocation3 + $0x3c] sm:$0xff]
        %v1668 = vld [vmem:[#allocation3 + $0x44] sm:$0x7]
        %v1669 = vld [vmem:[#allocation3 + $0x3e] sm:$0xff]
        %v1670 = vld [vmem:[#allocation3 + $0x46] sm:$0x7]
        %1677 = vrot.lane.b32.xlu0 %v1629, 64
        %v1678 = vpop.permute.xlu0 %1677
        %1679 = vrot.lane.b32.xlu0 %v1630, 64
        %v1680 = vpop.permute.xlu0 %1679
        %1681 = vrot.lane.b32.xlu0 %v1631, 64
        %v1682 = vpop.permute.xlu0 %1681
        %1683 = vrot.lane.b32.xlu0 %v1632, 64
        %v1684 = vpop.permute.xlu0 %1683
        %1685 = vrot.lane.b32.xlu0 %v1633, 64
        %v1686 = vpop.permute.xlu0 %1685
        %1687 = vrot.lane.b32.xlu0 %v1634, 64
        %v1688 = vpop.permute.xlu0 %1687
        %1701 = vrot.lane.b32.xlu0 %v1641, 64
        %v1702 = vpop.permute.xlu0 %1701
        %1703 = vrot.lane.b32.xlu0 %v1642, 64
        %v1704 = vpop.permute.xlu0 %1703
        %1705 = vrot.lane.b32.xlu0 %v1643, 64
        %v1706 = vpop.permute.xlu0 %1705
        %1707 = vrot.lane.b32.xlu0 %v1644, 64
        %v1708 = vpop.permute.xlu0 %1707
        %1709 = vrot.lane.b32.xlu0 %v1645, 64
        %v1710 = vpop.permute.xlu0 %1709
        %1711 = vrot.lane.b32.xlu0 %v1646, 64
        %v1712 = vpop.permute.xlu0 %1711
        %1721 = vrot.lane.b32.xlu0 %v1649, 64
        %v1722 = vpop.permute.xlu0 %1721
        %1723 = vrot.lane.b32.xlu0 %v1650, 64
        %v1724 = vpop.permute.xlu0 %1723
        %1729 = vrot.lane.b32.xlu0 %v1653, 64
        %v1730 = vpop.permute.xlu0 %1729
        %1731 = vrot.lane.b32.xlu0 %v1654, 64
        %v1732 = vpop.permute.xlu0 %1731
        %1737 = vrot.lane.b32.xlu0 %v1657, 64
        %v1738 = vpop.permute.xlu0 %1737
        %1739 = vrot.lane.b32.xlu0 %v1658, 64
        %v1740 = vpop.permute.xlu0 %1739
        %1745 = vrot.lane.b32.xlu0 %v1661, 64
        %v1746 = vpop.permute.xlu0 %1745
        %1747 = vrot.lane.b32.xlu0 %v1662, 64
        %v1748 = vpop.permute.xlu0 %1747
        %1753 = vrot.lane.b32.xlu0 %v1665, 64
        %v1754 = vpop.permute.xlu0 %1753
        %1755 = vrot.lane.b32.xlu0 %v1666, 64
        %v1756 = vpop.permute.xlu0 %1755
        %1761 = vrot.lane.b32.xlu0 %v1669, 64
        %v1762 = vpop.permute.xlu0 %1761
        %1763 = vrot.lane.b32.xlu0 %v1670, 64
        %v1764 = vpop.permute.xlu0 %1763
        %v1767 = vsel %vm381, %v1623, %v1678
        %v1768 = vsel %vm381, %v1624, %v1680
        %v1769 = vsel %vm381, %v1625, %v1682
        %v1770 = vsel %vm381, %v1626, %v1684
        %v1771 = vsel %vm381, %v1627, %v1686
        %v1772 = vsel %vm381, %v1628, %v1688
        %v1773 = vsel %vm381, %v1635, %v1702
        %v1774 = vsel %vm381, %v1636, %v1704
        %v1775 = vsel %vm381, %v1637, %v1706
        %v1776 = vsel %vm381, %v1638, %v1708
        %v1777 = vsel %vm381, %v1639, %v1710
        %v1778 = vsel %vm381, %v1640, %v1712
        %v1779 = vsel %vm381, %v1647, %v1722
        %v1780 = vsel %vm381, %v1648, %v1724
        %v1781 = vsel %vm381, %v1651, %v1730
        %v1782 = vsel %vm381, %v1652, %v1732
        %v1783 = vsel %vm381, %v1655, %v1738
        %v1784 = vsel %vm381, %v1656, %v1740
        %v1785 = vsel %vm381, %v1659, %v1746
        %v1786 = vsel %vm381, %v1660, %v1748
        %v1787 = vsel %vm381, %v1663, %v1754
        %v1788 = vsel %vm381, %v1664, %v1756
        %v1789 = vsel %vm381, %v1667, %v1762
        %v1790 = vsel %vm381, %v1668, %v1764
        %v1791 = vpack.c.bf16 %v1768, %v1767
        %v1792 = vpack.c.bf16 %v1774, %v1773
        %v1793 = vpack.c.bf16 %v1769, %v1768
        %v1794 = vpack.c.bf16 %v1775, %v1774
        %v1795 = vpack.c.bf16 %v1770, %v1769
        %v1796 = vpack.c.bf16 %v1776, %v1775
        %v1797 = vpack.c.bf16 %v1771, %v1770
        %v1798 = vpack.c.bf16 %v1777, %v1776
        %v1799 = vpack.c.bf16 %v1779, %v1771
        %v1800 = vpack.c.bf16 %v1781, %v1777
        %v1801 = vpack.c.bf16 %v1783, %v1779
        %v1802 = vpack.c.bf16 %v1785, %v1781
        %v1803 = vpack.c.bf16 %v1772, %v1771
        %v1804 = vpack.c.bf16 %v1778, %v1777
        %v1805 = vpack.c.bf16 %v1780, %v1779
        %v1806 = vpack.c.bf16 %v1782, %v1781
        %v1807 = vpack.c.bf16 %v1784, %v1783
        %v1808 = vpack.c.bf16 %v1786, %v1785
        %v1809 = vpack.c.bf16 %v1788, %v1787
        %v1810 = vpack.c.bf16 %v1790, %v1789
        %v1811 = vld [vmem:[%s5] sm:$0xf]
        %v1812 = vld [vmem:[%s5 + $0x4] sm:$0xf]
        %v1813 = vld [vmem:[%s5 + $0x8] sm:$0xf]
        %v1814 = vld [vmem:[%s5 + $0xc] sm:$0xf]
        %v1815 = vld [vmem:[%s5 + $0x10] sm:$0xf]
        %v1816 = vld [vmem:[%s5 + $0x14] sm:$0xf]
        %v1817 = vld [vmem:[%s5 + $0x18] sm:$0xf]
        %v1818 = vld [vmem:[%s5 + $0x1c] sm:$0xf]
        %v1819 = vld [vmem:[%s5 + $0x20] sm:$0xf]
        %v1820 = vld [vmem:[%s5 + $0x24] sm:$0xf]
        %v1821 = vld [vmem:[%s5 + $0x28] sm:$0xf]
        %v1822 = vld [vmem:[%s5 + $0x2c] sm:$0xf]
        %v1823 = vld [vmem:[%s5 + $0x30] sm:$0xf]
        %v1824 = vld [vmem:[%s5 + $0x34] sm:$0xf]
        %v1825 = vld [vmem:[%s5 + $0x38] sm:$0xf]
        %v1826 = vld [vmem:[%s5 + $0x3c] sm:$0xf]
        %v1827 = vld [vmem:[%s5 + $0x40] sm:$0xf]
        %v1828 = vld [vmem:[%s5 + $0x44] sm:$0xf]
        %v1829 = vld [vmem:[%s5 + $0x48] sm:$0xf]
        %v1830 = vld [vmem:[%s5 + $0x4c] sm:$0xf]
        %v1831 = vld [vmem:[%s5 + $0x50] sm:$0xf]
        %v1832 = vld [vmem:[%s5 + $0x54] sm:$0xf]
        %v1833 = vld [vmem:[%s5 + $0x58] sm:$0xf]
        %v1834 = vld [vmem:[%s5 + $0x5c] sm:$0xf]
        %v1835 = vld [vmem:[%s5 + $0x60] sm:$0xf]
        %v1836 = vld [vmem:[%s5 + $0x64] sm:$0xf]
        %v1837 = vld [vmem:[%s5 + $0x68] sm:$0xf]
        %v1838 = vld [vmem:[%s5 + $0x6c] sm:$0xf]
        %v1839 = vld [vmem:[%s5 + $0x70] sm:$0xf]
        %v1840 = vld [vmem:[%s5 + $0x74] sm:$0xf]
        %v1841 = vld [vmem:[%s5 + $0x78] sm:$0xf]
        %v1842 = vld [vmem:[%s5 + $0x7c] sm:$0xf]
        %v1843 = vld [vmem:[%s5 + $0x80] sm:$0xf]
        %v1844 = vld [vmem:[%s5 + $0x84] sm:$0xf]
        %v1845 = vld [vmem:[%s5 + $0x88] sm:$0xf]
        %v1846 = vld [vmem:[%s5 + $0x8c] sm:$0xf]
        %v1847 = vld [vmem:[%s5 + $0x90] sm:$0xf]
        %v1848 = vld [vmem:[%s5 + $0x94] sm:$0xf]
        %v1849 = vld [vmem:[%s5 + $0x98] sm:$0xf]
        %v1850 = vld [vmem:[%s5 + $0x9c] sm:$0xf]
        %v1851 = vld [vmem:[%s5 + $0xa0] sm:$0xf]
        %v1852 = vld [vmem:[%s5 + $0xa4] sm:$0xf]
        %v1853 = vld [vmem:[%s5 + $0xa8] sm:$0xf]
        %v1854 = vld [vmem:[%s5 + $0xac] sm:$0xf]
        %v1855 = vld [vmem:[%s5 + $0xb0] sm:$0xf]
        %v1856 = vld [vmem:[%s5 + $0xb4] sm:$0xf]
        %v1857 = vld [vmem:[%s5 + $0xb8] sm:$0xf]
        %v1858 = vld [vmem:[%s5 + $0xbc] sm:$0xf]
        %v1859 = vld [vmem:[%s5 + $0xc0] sm:$0xf]
        %v1860 = vld [vmem:[%s5 + $0xc4] sm:$0xf]
        %v1861 = vld [vmem:[%s5 + $0xc8] sm:$0xf]
        %v1862 = vld [vmem:[%s5 + $0xcc] sm:$0xf]
        %v1863 = vld [vmem:[%s5 + $0xd0] sm:$0xf]
        %v1864 = vld [vmem:[%s5 + $0xd4] sm:$0xf]
        %v1865 = vld [vmem:[%s5 + $0xd8] sm:$0xf]
        %v1866 = vld [vmem:[%s5 + $0xdc] sm:$0xf]
        %v1867 = vld [vmem:[%s5 + $0xe0] sm:$0xf]
        %v1868 = vld [vmem:[%s5 + $0xe4] sm:$0xf]
        %v1869 = vld [vmem:[%s5 + $0xe8] sm:$0xf]
        %v1870 = vld [vmem:[%s5 + $0xec] sm:$0xf]
        %v1871 = vld [vmem:[%s5 + $0xf0] sm:$0xf]
        %v1872 = vld [vmem:[%s5 + $0xf4] sm:$0xf]
        %v1873 = vld [vmem:[%s5 + $0xf8] sm:$0xf]
        %v1874 = vld [vmem:[%s5 + $0xfc] sm:$0xf]
        %v1875 = vld [vmem:[%s5 + $0x100] sm:$0xf]
        %v1876 = vld [vmem:[%s5 + $0x104] sm:$0xf]
        %v1877 = vld [vmem:[%s5 + $0x108] sm:$0xf]
        %v1878 = vld [vmem:[%s5 + $0x10c] sm:$0xf]
        %v1879 = vld [vmem:[%s5 + $0x110] sm:$0xf]
        %v1880 = vld [vmem:[%s5 + $0x114] sm:$0xf]
        %v1881 = vld [vmem:[%s5 + $0x118] sm:$0xf]
        %v1882 = vld [vmem:[%s5 + $0x11c] sm:$0xf]
        %v1883 = vld [vmem:[%s5 + $0x120] sm:$0xf]
        %v1884 = vld [vmem:[%s5 + $0x124] sm:$0xf]
        %v1885 = vld [vmem:[%s5 + $0x128] sm:$0xf]
        %v1886 = vld [vmem:[%s5 + $0x12c] sm:$0xf]
        %v1887 = vld [vmem:[%s5 + $0x130] sm:$0xf]
        %v1888 = vld [vmem:[%s5 + $0x134] sm:$0xf]
        %v1889 = vld [vmem:[%s5 + $0x138] sm:$0xf]
        %v1890 = vld [vmem:[%s5 + $0x13c] sm:$0xf]
        %v1891 = vld [vmem:[%s5 + $0x140] sm:$0xf]
        %v1892 = vld [vmem:[%s5 + $0x144] sm:$0xf]
        %v1893 = vld [vmem:[%s5 + $0x148] sm:$0xf]
        %v1894 = vld [vmem:[%s5 + $0x14c] sm:$0xf]
        %v1895 = vld [vmem:[%s5 + $0x150] sm:$0xf]
        %v1896 = vld [vmem:[%s5 + $0x154] sm:$0xf]
        %v1897 = vld [vmem:[%s5 + $0x158] sm:$0xf]
        %v1898 = vld [vmem:[%s5 + $0x15c] sm:$0xf]
        %v1899 = vld [vmem:[%s5 + $0x160] sm:$0xf]
        %v1900 = vld [vmem:[%s5 + $0x164] sm:$0xf]
        %v1901 = vld [vmem:[%s5 + $0x168] sm:$0xf]
        %v1902 = vld [vmem:[%s5 + $0x16c] sm:$0xf]
        %v1903 = vld [vmem:[%s5 + $0x170] sm:$0xf]
        %v1904 = vld [vmem:[%s5 + $0x174] sm:$0xf]
        %v1905 = vld [vmem:[%s5 + $0x178] sm:$0xf]
        %v1906 = vld [vmem:[%s5 + $0x17c] sm:$0xf]
        %v1907 = vld [vmem:[%s5 + $0x180] sm:$0xf]
        %v1908 = vld [vmem:[%s5 + $0x184] sm:$0xf]
        %v1909 = vld [vmem:[%s5 + $0x188] sm:$0xf]
        %v1910 = vld [vmem:[%s5 + $0x18c] sm:$0xf]
        %v1911 = vld [vmem:[%s5 + $0x190] sm:$0xf]
        %v1912 = vld [vmem:[%s5 + $0x194] sm:$0xf]
        %v1913 = vld [vmem:[%s5 + $0x198] sm:$0xf]
        %v1914 = vld [vmem:[%s5 + $0x19c] sm:$0xf]
        %v1915 = vld [vmem:[%s5 + $0x1a0] sm:$0xf]
        %v1916 = vld [vmem:[%s5 + $0x1a4] sm:$0xf]
        %v1917 = vld [vmem:[%s5 + $0x1a8] sm:$0xf]
        %v1918 = vld [vmem:[%s5 + $0x1ac] sm:$0xf]
        %v1919 = vld [vmem:[%s5 + $0x1b0] sm:$0xf]
        %v1920 = vld [vmem:[%s5 + $0x1b4] sm:$0xf]
        %v1921 = vld [vmem:[%s5 + $0x1b8] sm:$0xf]
        %v1922 = vld [vmem:[%s5 + $0x1bc] sm:$0xf]
        %v1923 = vld [vmem:[%s5 + $0x1c0] sm:$0xf]
        %v1924 = vld [vmem:[%s5 + $0x1c4] sm:$0xf]
        %v1925 = vld [vmem:[%s5 + $0x1c8] sm:$0xf]
        %v1926 = vld [vmem:[%s5 + $0x1cc] sm:$0xf]
        %v1927 = vld [vmem:[%s5 + $0x1d0] sm:$0xf]
        %v1928 = vld [vmem:[%s5 + $0x1d4] sm:$0xf]
        %v1929 = vld [vmem:[%s5 + $0x1d8] sm:$0xf]
        %v1930 = vld [vmem:[%s5 + $0x1dc] sm:$0xf]
        %v1931 = vld [vmem:[%s5 + $0x1e0] sm:$0xf]
        %v1932 = vld [vmem:[%s5 + $0x1e4] sm:$0xf]
        %v1933 = vld [vmem:[%s5 + $0x1e8] sm:$0xf]
        %v1934 = vld [vmem:[%s5 + $0x1ec] sm:$0xf]
        %v1935 = vld [vmem:[%s5 + $0x1f0] sm:$0xf]
        %v1936 = vld [vmem:[%s5 + $0x1f4] sm:$0xf]
        %v1937 = vld [vmem:[%s5 + $0x1f8] sm:$0xf]
        %v1938 = vld [vmem:[%s5 + $0x1fc] sm:$0xf]
        %v1939 = vld [vmem:[%s6] sm:$0x1]
        %v1941 = vlaneseq
        %v1942 = vshrl.u32 %v1941, 7
        %v1943 = vsub.s32 0, %v1942
        %v1944 = vrot.slane %v1939, %v1943
        %v2074 = vunpack.c.l.b16 %v1811
        %v2075 = vunpack.c.l.b16 %v1812
        %v2076 = vunpack.c.l.b16 %v1813
        %v2077 = vunpack.c.l.b16 %v1814
        %v2078 = vunpack.c.l.b16 %v1815
        %v2079 = vunpack.c.l.b16 %v1816
        %v2080 = vunpack.c.l.b16 %v1817
        %v2081 = vunpack.c.l.b16 %v1818
        %v2082 = vunpack.c.l.b16 %v1819
        %v2083 = vunpack.c.l.b16 %v1820
        %v2084 = vunpack.c.l.b16 %v1821
        %v2085 = vunpack.c.l.b16 %v1822
        %v2086 = vunpack.c.l.b16 %v1823
        %v2087 = vunpack.c.l.b16 %v1824
        %v2088 = vunpack.c.l.b16 %v1825
        %v2089 = vunpack.c.l.b16 %v1826
        %v2090 = vunpack.c.l.b16 %v1827
        %v2091 = vunpack.c.l.b16 %v1828
        %v2092 = vunpack.c.l.b16 %v1829
        %v2093 = vunpack.c.l.b16 %v1830
        %v2094 = vunpack.c.l.b16 %v1831
        %v2095 = vunpack.c.l.b16 %v1832
        %v2096 = vunpack.c.l.b16 %v1833
        %v2097 = vunpack.c.l.b16 %v1834
        %v2098 = vunpack.c.l.b16 %v1835
        %v2099 = vunpack.c.l.b16 %v1836
        %v2100 = vunpack.c.l.b16 %v1837
        %v2101 = vunpack.c.l.b16 %v1838
        %v2102 = vunpack.c.l.b16 %v1839
        %v2103 = vunpack.c.l.b16 %v1840
        %v2104 = vunpack.c.l.b16 %v1841
        %v2105 = vunpack.c.l.b16 %v1842
        %v2106 = vunpack.c.l.b16 %v1843
        %v2107 = vunpack.c.l.b16 %v1844
        %v2108 = vunpack.c.l.b16 %v1845
        %v2109 = vunpack.c.l.b16 %v1846
        %v2110 = vunpack.c.l.b16 %v1847
        %v2111 = vunpack.c.l.b16 %v1848
        %v2112 = vunpack.c.l.b16 %v1849
        %v2113 = vunpack.c.l.b16 %v1850
        %v2114 = vunpack.c.l.b16 %v1851
        %v2115 = vunpack.c.l.b16 %v1852
        %v2116 = vunpack.c.l.b16 %v1853
        %v2117 = vunpack.c.l.b16 %v1854
        %v2118 = vunpack.c.l.b16 %v1855
        %v2119 = vunpack.c.l.b16 %v1856
        %v2120 = vunpack.c.l.b16 %v1857
        %v2121 = vunpack.c.l.b16 %v1858
        %v2122 = vunpack.c.l.b16 %v1859
        %v2123 = vunpack.c.l.b16 %v1860
        %v2124 = vunpack.c.l.b16 %v1861
        %v2125 = vunpack.c.l.b16 %v1862
        %v2126 = vunpack.c.l.b16 %v1863
        %v2127 = vunpack.c.l.b16 %v1864
        %v2128 = vunpack.c.l.b16 %v1865
        %v2129 = vunpack.c.l.b16 %v1866
        %v2130 = vunpack.c.l.b16 %v1867
        %v2131 = vunpack.c.l.b16 %v1868
        %v2132 = vunpack.c.l.b16 %v1869
        %v2133 = vunpack.c.l.b16 %v1870
        %v2134 = vunpack.c.l.b16 %v1871
        %v2135 = vunpack.c.l.b16 %v1872
        %v2136 = vunpack.c.l.b16 %v1873
        %v2137 = vunpack.c.l.b16 %v1874
        %v2138 = vunpack.c.l.b16 %v1875
        %v2139 = vunpack.c.l.b16 %v1876
        %v2140 = vunpack.c.l.b16 %v1877
        %v2141 = vunpack.c.l.b16 %v1878
        %v2142 = vunpack.c.l.b16 %v1879
        %v2143 = vunpack.c.l.b16 %v1880
        %v2144 = vunpack.c.l.b16 %v1881
        %v2145 = vunpack.c.l.b16 %v1882
        %v2146 = vunpack.c.l.b16 %v1883
        %v2147 = vunpack.c.l.b16 %v1884
        %v2148 = vunpack.c.l.b16 %v1885
        %v2149 = vunpack.c.l.b16 %v1886
        %v2150 = vunpack.c.l.b16 %v1887
        %v2151 = vunpack.c.l.b16 %v1888
        %v2152 = vunpack.c.l.b16 %v1889
        %v2153 = vunpack.c.l.b16 %v1890
        %v2154 = vunpack.c.l.b16 %v1891
        %v2155 = vunpack.c.l.b16 %v1892
        %v2156 = vunpack.c.l.b16 %v1893
        %v2157 = vunpack.c.l.b16 %v1894
        %v2158 = vunpack.c.l.b16 %v1895
        %v2159 = vunpack.c.l.b16 %v1896
        %v2160 = vunpack.c.l.b16 %v1897
        %v2161 = vunpack.c.l.b16 %v1898
        %v2162 = vunpack.c.l.b16 %v1899
        %v2163 = vunpack.c.l.b16 %v1900
        %v2164 = vunpack.c.l.b16 %v1901
        %v2165 = vunpack.c.l.b16 %v1902
        %v2166 = vunpack.c.l.b16 %v1903
        %v2167 = vunpack.c.l.b16 %v1904
        %v2168 = vunpack.c.l.b16 %v1905
        %v2169 = vunpack.c.l.b16 %v1906
        %v2170 = vunpack.c.l.b16 %v1907
        %v2171 = vunpack.c.l.b16 %v1908
        %v2172 = vunpack.c.l.b16 %v1909
        %v2173 = vunpack.c.l.b16 %v1910
        %v2174 = vunpack.c.l.b16 %v1911
        %v2175 = vunpack.c.l.b16 %v1912
        %v2176 = vunpack.c.l.b16 %v1913
        %v2177 = vunpack.c.l.b16 %v1914
        %v2178 = vunpack.c.l.b16 %v1915
        %v2179 = vunpack.c.l.b16 %v1916
        %v2180 = vunpack.c.l.b16 %v1917
        %v2181 = vunpack.c.l.b16 %v1918
        %v2182 = vunpack.c.l.b16 %v1919
        %v2183 = vunpack.c.l.b16 %v1920
        %v2184 = vunpack.c.l.b16 %v1921
        %v2185 = vunpack.c.l.b16 %v1922
        %v2186 = vunpack.c.l.b16 %v1923
        %v2187 = vunpack.c.l.b16 %v1924
        %v2188 = vunpack.c.l.b16 %v1925
        %v2189 = vunpack.c.l.b16 %v1926
        %v2190 = vunpack.c.l.b16 %v1927
        %v2191 = vunpack.c.l.b16 %v1928
        %v2192 = vunpack.c.l.b16 %v1929
        %v2193 = vunpack.c.l.b16 %v1930
        %v2194 = vunpack.c.l.b16 %v1931
        %v2195 = vunpack.c.l.b16 %v1932
        %v2196 = vunpack.c.l.b16 %v1933
        %v2197 = vunpack.c.l.b16 %v1934
        %v2198 = vunpack.c.l.b16 %v1935
        %v2199 = vunpack.c.l.b16 %v1936
        %v2200 = vunpack.c.l.b16 %v1937
        %v2201 = vunpack.c.l.b16 %v1938
        %v2202 = vpack.c.b16 %v2075, %v2074
        %v2203 = vpack.c.b16 %v2077, %v2076
        %v2204 = vpack.c.b16 %v2079, %v2078
        %v2205 = vpack.c.b16 %v2081, %v2080
        %v2206 = vpack.c.b16 %v2083, %v2082
        %v2207 = vpack.c.b16 %v2085, %v2084
        %v2208 = vpack.c.b16 %v2087, %v2086
        %v2209 = vpack.c.b16 %v2089, %v2088
        %v2210 = vpack.c.b16 %v2091, %v2090
        %v2211 = vpack.c.b16 %v2093, %v2092
        %v2212 = vpack.c.b16 %v2095, %v2094
        %v2213 = vpack.c.b16 %v2097, %v2096
        %v2214 = vpack.c.b16 %v2099, %v2098
        %v2215 = vpack.c.b16 %v2101, %v2100
        %v2216 = vpack.c.b16 %v2103, %v2102
        %v2217 = vpack.c.b16 %v2105, %v2104
        %v2218 = vpack.c.b16 %v2107, %v2106
        %v2219 = vpack.c.b16 %v2109, %v2108
        %v2220 = vpack.c.b16 %v2111, %v2110
        %v2221 = vpack.c.b16 %v2113, %v2112
        %v2222 = vpack.c.b16 %v2115, %v2114
        %v2223 = vpack.c.b16 %v2117, %v2116
        %v2224 = vpack.c.b16 %v2119, %v2118
        %v2225 = vpack.c.b16 %v2121, %v2120
        %v2226 = vpack.c.b16 %v2123, %v2122
        %v2227 = vpack.c.b16 %v2125, %v2124
        %v2228 = vpack.c.b16 %v2127, %v2126
        %v2229 = vpack.c.b16 %v2129, %v2128
        %v2230 = vpack.c.b16 %v2131, %v2130
        %v2231 = vpack.c.b16 %v2133, %v2132
        %v2232 = vpack.c.b16 %v2135, %v2134
        %v2233 = vpack.c.b16 %v2137, %v2136
        %v2234 = vpack.c.b16 %v2139, %v2138
        %v2235 = vpack.c.b16 %v2141, %v2140
        %v2236 = vpack.c.b16 %v2143, %v2142
        %v2237 = vpack.c.b16 %v2145, %v2144
        %v2238 = vpack.c.b16 %v2147, %v2146
        %v2239 = vpack.c.b16 %v2149, %v2148
        %v2240 = vpack.c.b16 %v2151, %v2150
        %v2241 = vpack.c.b16 %v2153, %v2152
        %v2242 = vpack.c.b16 %v2155, %v2154
        %v2243 = vpack.c.b16 %v2157, %v2156
        %v2244 = vpack.c.b16 %v2159, %v2158
        %v2245 = vpack.c.b16 %v2161, %v2160
        %v2246 = vpack.c.b16 %v2163, %v2162
        %v2247 = vpack.c.b16 %v2165, %v2164
        %v2248 = vpack.c.b16 %v2167, %v2166
        %v2249 = vpack.c.b16 %v2169, %v2168
        %v2250 = vpack.c.b16 %v2171, %v2170
        %v2251 = vpack.c.b16 %v2173, %v2172
        %v2252 = vpack.c.b16 %v2175, %v2174
        %v2253 = vpack.c.b16 %v2177, %v2176
        %v2254 = vpack.c.b16 %v2179, %v2178
        %v2255 = vpack.c.b16 %v2181, %v2180
        %v2256 = vpack.c.b16 %v2183, %v2182
        %v2257 = vpack.c.b16 %v2185, %v2184
        %v2258 = vpack.c.b16 %v2187, %v2186
        %v2259 = vpack.c.b16 %v2189, %v2188
        %v2260 = vpack.c.b16 %v2191, %v2190
        %v2261 = vpack.c.b16 %v2193, %v2192
        %v2262 = vpack.c.b16 %v2195, %v2194
        %v2263 = vpack.c.b16 %v2197, %v2196
        %v2264 = vpack.c.b16 %v2199, %v2198
        %v2265 = vpack.c.b16 %v2201, %v2200
        %2330 = vmatprep.subr.bf16.mxu0 0
        %2331 = vmatpush1.bf16.msra.mxu0 %v2209
        %2332 = vmatprep.subr.bf16.mxu0 0
        %2333 = vmatpush1.bf16.msra.mxu0 %v2208
        %2334 = vmatprep.subr.bf16.mxu0 0
        %2335 = vmatpush1.bf16.msra.mxu0 %v2207
        %2336 = vmatprep.subr.bf16.mxu0 0
        %2337 = vmatpush1.bf16.msra.mxu0 %v2206
        %2338 = vmatprep.subr.bf16.mxu0 0
        %2339 = vmatpush1.bf16.msra.mxu0 %v2205
        %2340 = vmatprep.subr.bf16.mxu0 0
        %2341 = vmatpush1.bf16.msra.mxu0 %v2204
        %2342 = vmatprep.subr.bf16.mxu0 0
        %2343 = vmatpush1.bf16.msra.mxu0 %v2203
        %2344 = vmatprep.subr.bf16.mxu0 0
        %2345 = vmatpush1.bf16.msra.mxu0 %v2202
        %2346 = vmatprep.subr.bf16.mxu0 0
        %2347 = vmatpush2.bf16.msra.mxu0 %v2217
        %2348 = vmatprep.subr.bf16.mxu0 0
        %2349 = vmatpush2.bf16.msra.mxu0 %v2216
        %2350 = vmatprep.subr.bf16.mxu0 0
        %2351 = vmatpush2.bf16.msra.mxu0 %v2215
        %2352 = vmatprep.subr.bf16.mxu0 0
        %2353 = vmatpush2.bf16.msra.mxu0 %v2214
        %2354 = vmatprep.subr.bf16.mxu0 0
        %2355 = vmatpush2.bf16.msra.mxu0 %v2213
        %2356 = vmatprep.subr.bf16.mxu0 0
        %2357 = vmatpush2.bf16.msra.mxu0 %v2212
        %2358 = vmatprep.subr.bf16.mxu0 0
        %2359 = vmatpush2.bf16.msra.mxu0 %v2211
        %2360 = vmatprep.subr.bf16.mxu0 0
        %2361 = vmatpush2.bf16.msra.mxu0 %v2210
        %2362 = vmatprep.mubr.bf16.mxu0 %v1792
        %2363 = vmatmul.mubr.bf16.gmra.mxu0 %v1791
        %v2364 = vpop.f32.mrf.mxu0
        %v2365 = vadd.f32 %v1944, %v2364
        %v2366 = vpop.f32.mrf.mxu0
        %v2367 = vpop.f32.mrf.mxu0
        %v2368 = vadd.f32 %v1944, %v2367
        %v2369 = vpop.f32.mrf.mxu0
        %2370 = vmatprep.mubr.bf16.mxu0 %v1796
        %2371 = vmatmul.mubr.bf16.gmra.mxu0 %v1795
        %v2372 = vpop.f32.mrf.mxu0
        %v2373 = vadd.f32 %v1944, %v2372
        %v2374 = vpop.f32.mrf.mxu0
        %v2375 = vpop.f32.mrf.mxu0
        %v2376 = vadd.f32 %v1944, %v2375
        %v2377 = vpop.f32.mrf.mxu0
        %2378 = vmatprep.mubr.bf16.mxu0 %v1804
        %2379 = vmatmul.mubr.bf16.gmra.mxu0 %v1803
        %v2380 = vpop.f32.mrf.mxu0
        %v2381 = vadd.f32 %v1944, %v2380
        %v2382 = vpop.f32.mrf.mxu0
        %v2383 = vpop.f32.mrf.mxu0
        %v2384 = vadd.f32 %v1944, %v2383
        %v2385 = vpop.f32.mrf.mxu0
        %2386 = vdwg.mxu0
        %2387 = vmatprep.subr.bf16.mxu0 0
        %2388 = vmatpush1.bf16.msra.mxu0 %v2225
        %2389 = vmatprep.subr.bf16.mxu0 0
        %2390 = vmatpush1.bf16.msra.mxu0 %v2224
        %2391 = vmatprep.subr.bf16.mxu0 0
        %2392 = vmatpush1.bf16.msra.mxu0 %v2223
        %2393 = vmatprep.subr.bf16.mxu0 0
        %2394 = vmatpush1.bf16.msra.mxu0 %v2222
        %2395 = vmatprep.subr.bf16.mxu0 0
        %2396 = vmatpush1.bf16.msra.mxu0 %v2221
        %2397 = vmatprep.subr.bf16.mxu0 0
        %2398 = vmatpush1.bf16.msra.mxu0 %v2220
        %2399 = vmatprep.subr.bf16.mxu0 0
        %2400 = vmatpush1.bf16.msra.mxu0 %v2219
        %2401 = vmatprep.subr.bf16.mxu0 0
        %2402 = vmatpush1.bf16.msra.mxu0 %v2218
        %2403 = vmatprep.subr.bf16.mxu0 0
        %2404 = vmatpush2.bf16.msra.mxu0 %v2233
        %2405 = vmatprep.subr.bf16.mxu0 0
        %2406 = vmatpush2.bf16.msra.mxu0 %v2232
        %2407 = vmatprep.subr.bf16.mxu0 0
        %2408 = vmatpush2.bf16.msra.mxu0 %v2231
        %2409 = vmatprep.subr.bf16.mxu0 0
        %2410 = vmatpush2.bf16.msra.mxu0 %v2230
        %2411 = vmatprep.subr.bf16.mxu0 0
        %2412 = vmatpush2.bf16.msra.mxu0 %v2229
        %2413 = vmatprep.subr.bf16.mxu0 0
        %2414 = vmatpush2.bf16.msra.mxu0 %v2228
        %2415 = vmatprep.subr.bf16.mxu0 0
        %2416 = vmatpush2.bf16.msra.mxu0 %v2227
        %2417 = vmatprep.subr.bf16.mxu0 0
        %2418 = vmatpush2.bf16.msra.mxu0 %v2226
        %2419 = vmatprep.mubr.bf16.mxu0 %v1794
        %2420 = vmatmul.mubr.bf16.gmra.mxu0 %v1793
        %v2421 = vpop.f32.mrf.mxu0
        %v2422 = vadd.f32 %v2365, %v2421
        %v2423 = vpop.f32.mrf.mxu0
        %v2424 = vpop.f32.mrf.mxu0
        %v2425 = vadd.f32 %v2368, %v2424
        %v2426 = vpop.f32.mrf.mxu0
        %2427 = vmatprep.mubr.bf16.mxu0 %v1798
        %2428 = vmatmul.mubr.bf16.gmra.mxu0 %v1797
        %v2429 = vpop.f32.mrf.mxu0
        %v2430 = vadd.f32 %v2373, %v2429
        %v2431 = vpop.f32.mrf.mxu0
        %v2432 = vpop.f32.mrf.mxu0
        %v2433 = vadd.f32 %v2376, %v2432
        %v2434 = vpop.f32.mrf.mxu0
        %2435 = vmatprep.mubr.bf16.mxu0 %v1806
        %2436 = vmatmul.mubr.bf16.gmra.mxu0 %v1805
        %v2437 = vpop.f32.mrf.mxu0
        %v2438 = vadd.f32 %v2381, %v2437
        %v2439 = vpop.f32.mrf.mxu0
        %v2440 = vpop.f32.mrf.mxu0
        %v2441 = vadd.f32 %v2384, %v2440
        %v2442 = vpop.f32.mrf.mxu0
        %2443 = vdwg.mxu0
        %2444 = vmatprep.subr.bf16.mxu0 0
        %2445 = vmatpush1.bf16.msra.mxu0 %v2241
        %2446 = vmatprep.subr.bf16.mxu0 0
        %2447 = vmatpush1.bf16.msra.mxu0 %v2240
        %2448 = vmatprep.subr.bf16.mxu0 0
        %2449 = vmatpush1.bf16.msra.mxu0 %v2239
        %2450 = vmatprep.subr.bf16.mxu0 0
        %2451 = vmatpush1.bf16.msra.mxu0 %v2238
        %2452 = vmatprep.subr.bf16.mxu0 0
        %2453 = vmatpush1.bf16.msra.mxu0 %v2237
        %2454 = vmatprep.subr.bf16.mxu0 0
        %2455 = vmatpush1.bf16.msra.mxu0 %v2236
        %2456 = vmatprep.subr.bf16.mxu0 0
        %2457 = vmatpush1.bf16.msra.mxu0 %v2235
        %2458 = vmatprep.subr.bf16.mxu0 0
        %2459 = vmatpush1.bf16.msra.mxu0 %v2234
        %2460 = vmatprep.subr.bf16.mxu0 0
        %2461 = vmatpush2.bf16.msra.mxu0 %v2249
        %2462 = vmatprep.subr.bf16.mxu0 0
        %2463 = vmatpush2.bf16.msra.mxu0 %v2248
        %2464 = vmatprep.subr.bf16.mxu0 0
        %2465 = vmatpush2.bf16.msra.mxu0 %v2247
        %2466 = vmatprep.subr.bf16.mxu0 0
        %2467 = vmatpush2.bf16.msra.mxu0 %v2246
        %2468 = vmatprep.subr.bf16.mxu0 0
        %2469 = vmatpush2.bf16.msra.mxu0 %v2245
        %2470 = vmatprep.subr.bf16.mxu0 0
        %2471 = vmatpush2.bf16.msra.mxu0 %v2244
        %2472 = vmatprep.subr.bf16.mxu0 0
        %2473 = vmatpush2.bf16.msra.mxu0 %v2243
        %2474 = vmatprep.subr.bf16.mxu0 0
        %2475 = vmatpush2.bf16.msra.mxu0 %v2242
        %2476 = vmatprep.mubr.bf16.mxu0 %v1796
        %2477 = vmatmul.mubr.bf16.gmra.mxu0 %v1795
        %v2478 = vpop.f32.mrf.mxu0
        %v2479 = vadd.f32 %v2422, %v2478
        %v2480 = vpop.f32.mrf.mxu0
        %v2481 = vpop.f32.mrf.mxu0
        %v2482 = vadd.f32 %v2425, %v2481
        %v2483 = vpop.f32.mrf.mxu0
        %2484 = vmatprep.mubr.bf16.mxu0 %v1800
        %2485 = vmatmul.mubr.bf16.gmra.mxu0 %v1799
        %v2486 = vpop.f32.mrf.mxu0
        %v2487 = vadd.f32 %v2430, %v2486
        %v2488 = vpop.f32.mrf.mxu0
        %v2489 = vpop.f32.mrf.mxu0
        %v2490 = vadd.f32 %v2433, %v2489
        %v2491 = vpop.f32.mrf.mxu0
        %2492 = vmatprep.mubr.bf16.mxu0 %v1808
        %2493 = vmatmul.mubr.bf16.gmra.mxu0 %v1807
        %v2494 = vpop.f32.mrf.mxu0
        %v2495 = vadd.f32 %v2438, %v2494
        %v2496 = vpop.f32.mrf.mxu0
        %v2497 = vpop.f32.mrf.mxu0
        %v2498 = vadd.f32 %v2441, %v2497
        %v2499 = vpop.f32.mrf.mxu0
        %2500 = vdwg.mxu0
        %2501 = vmatprep.subr.bf16.mxu0 0
        %2502 = vmatpush1.bf16.msra.mxu0 %v2257
        %2503 = vmatprep.subr.bf16.mxu0 0
        %2504 = vmatpush1.bf16.msra.mxu0 %v2256
        %2505 = vmatprep.subr.bf16.mxu0 0
        %2506 = vmatpush1.bf16.msra.mxu0 %v2255
        %2507 = vmatprep.subr.bf16.mxu0 0
        %2508 = vmatpush1.bf16.msra.mxu0 %v2254
        %2509 = vmatprep.subr.bf16.mxu0 0
        %2510 = vmatpush1.bf16.msra.mxu0 %v2253
        %2511 = vmatprep.subr.bf16.mxu0 0
        %2512 = vmatpush1.bf16.msra.mxu0 %v2252
        %2513 = vmatprep.subr.bf16.mxu0 0
        %2514 = vmatpush1.bf16.msra.mxu0 %v2251
        %2515 = vmatprep.subr.bf16.mxu0 0
        %2516 = vmatpush1.bf16.msra.mxu0 %v2250
        %2517 = vmatprep.subr.bf16.mxu0 0
        %2518 = vmatpush2.bf16.msra.mxu0 %v2265
        %2519 = vmatprep.subr.bf16.mxu0 0
        %2520 = vmatpush2.bf16.msra.mxu0 %v2264
        %2521 = vmatprep.subr.bf16.mxu0 0
        %2522 = vmatpush2.bf16.msra.mxu0 %v2263
        %2523 = vmatprep.subr.bf16.mxu0 0
        %2524 = vmatpush2.bf16.msra.mxu0 %v2262
        %2525 = vmatprep.subr.bf16.mxu0 0
        %2526 = vmatpush2.bf16.msra.mxu0 %v2261
        %2527 = vmatprep.subr.bf16.mxu0 0
        %2528 = vmatpush2.bf16.msra.mxu0 %v2260
        %2529 = vmatprep.subr.bf16.mxu0 0
        %2530 = vmatpush2.bf16.msra.mxu0 %v2259
        %2531 = vmatprep.subr.bf16.mxu0 0
        %2532 = vmatpush2.bf16.msra.mxu0 %v2258
        %2533 = vmatprep.mubr.bf16.mxu0 %v1798
        %2534 = vmatmul.mubr.bf16.gmra.mxu0 %v1797
        %v2535 = vpop.f32.mrf.mxu0
        %v2536 = vadd.f32 %v2479, %v2535
        %v2537 = vpop.f32.mrf.mxu0
        %v2538 = vpop.f32.mrf.mxu0
        %v2539 = vadd.f32 %v2482, %v2538
        %v2540 = vpop.f32.mrf.mxu0
        %2541 = vmatprep.mubr.bf16.mxu0 %v1802
        %2542 = vmatmul.mubr.bf16.gmra.mxu0 %v1801
        %v2543 = vpop.f32.mrf.mxu0
        %v2544 = vadd.f32 %v2487, %v2543
        %v2545 = vpop.f32.mrf.mxu0
        %v2546 = vpop.f32.mrf.mxu0
        %v2547 = vadd.f32 %v2490, %v2546
        %v2548 = vpop.f32.mrf.mxu0
        %2549 = vmatprep.mubr.bf16.mxu0 %v1810
        %2550 = vmatmul.mubr.bf16.gmra.mxu0 %v1809
        %v2551 = vpop.f32.mrf.mxu0
        %v2552 = vadd.f32 %v2495, %v2551
        %v2553 = vpop.f32.mrf.mxu0
        %v2554 = vpop.f32.mrf.mxu0
        %v2555 = vadd.f32 %v2498, %v2554
        %v2556 = vpop.f32.mrf.mxu0
        %2557 = vdwg.mxu0
        %v2558 = vmax.f32 %v2536, 0.0
        %v2559 = vmax.f32 %v2539, 0.0
        %v2560 = vmax.f32 %v2544, 0.0
        %v2561 = vmax.f32 %v2547, 0.0
        %v2562 = vmax.f32 %v2552, 0.0
        %v2563 = vmax.f32 %v2555, 0.0
        %vm2564 = vcmp.ne.f32.partialorder %v2536, %v2536
        %vm2565 = vcmp.ne.f32.partialorder %v2539, %v2539
        %vm2566 = vcmp.ne.f32.partialorder %v2544, %v2544
        %vm2567 = vcmp.ne.f32.partialorder %v2547, %v2547
        %vm2568 = vcmp.ne.f32.partialorder %v2552, %v2552
        %vm2569 = vcmp.ne.f32.partialorder %v2555, %v2555
        %v2570 = vadd.f32 %v2536, 0.0
        %v2571 = vadd.f32 %v2539, 0.0
        %v2572 = vadd.f32 %v2544, 0.0
        %v2573 = vadd.f32 %v2547, 0.0
        %v2574 = vadd.f32 %v2552, 0.0
        %v2575 = vadd.f32 %v2555, 0.0
        %v2576 = vand.u32 2147483647, %v2536
        %v2577 = vand.u32 2147483647, %v2539
        %v2578 = vand.u32 2147483647, %v2544
        %v2579 = vand.u32 2147483647, %v2547
        %v2580 = vand.u32 2147483647, %v2552
        %v2581 = vand.u32 2147483647, %v2555
        %v2582 = vsub.f32 0.0, %v2576
        %v2583 = vsub.f32 0.0, %v2577
        %v2584 = vsub.f32 0.0, %v2578
        %v2585 = vsub.f32 0.0, %v2579
        %v2586 = vsub.f32 0.0, %v2580
        %v2587 = vsub.f32 0.0, %v2581
        %v2588 = vmul.f32 %v2582, 1.442695
        %v2589 = vpow.pop %v2588
        %v2590 = vmul.f32 %v2583, 1.442695
        %v2591 = vpow.pop %v2590
        %v2592 = vmul.f32 %v2584, 1.442695
        %v2593 = vpow.pop %v2592
        %v2594 = vmul.f32 %v2585, 1.442695
        %v2595 = vpow.pop %v2594
        %v2596 = vmul.f32 %v2586, 1.442695
        %v2597 = vpow.pop %v2596
        %v2598 = vmul.f32 %v2587, 1.442695
        %v2599 = vpow.pop %v2598
        %v2600 = vadd.f32 %v2589, 1.0
        %v2601 = vlog2.pop %v2600
        %v2602 = vmul.f32 %v2601, 0.6931472
        %v2603 = vmul.f32 -0.5, %v2589
        %v2604 = vadd.f32 %v2603, 1.0
        %v2605 = vmul.f32 %v2604, %v2589
        %v2606 = vand.u32 2147483647, %v2589
        %vm2607 = vcmp.lt.f32.partialorder %v2606, 0.0004427343
        %v2608 = vsel %vm2607, %v2605, %v2602
        %v2609 = vadd.f32 %v2591, 1.0
        %v2610 = vlog2.pop %v2609
        %v2611 = vmul.f32 %v2610, 0.6931472
        %v2612 = vmul.f32 -0.5, %v2591
        %v2613 = vadd.f32 %v2612, 1.0
        %v2614 = vmul.f32 %v2613, %v2591
        %v2615 = vand.u32 2147483647, %v2591
        %vm2616 = vcmp.lt.f32.partialorder %v2615, 0.0004427343
        %v2617 = vsel %vm2616, %v2614, %v2611
        %v2618 = vadd.f32 %v2593, 1.0
        %v2619 = vlog2.pop %v2618
        %v2620 = vmul.f32 %v2619, 0.6931472
        %v2621 = vmul.f32 -0.5, %v2593
        %v2622 = vadd.f32 %v2621, 1.0
        %v2623 = vmul.f32 %v2622, %v2593
        %v2624 = vand.u32 2147483647, %v2593
        %vm2625 = vcmp.lt.f32.partialorder %v2624, 0.0004427343
        %v2626 = vsel %vm2625, %v2623, %v2620
        %v2627 = vadd.f32 %v2595, 1.0
        %v2628 = vlog2.pop %v2627
        %v2629 = vmul.f32 %v2628, 0.6931472
        %v2630 = vmul.f32 -0.5, %v2595
        %v2631 = vadd.f32 %v2630, 1.0
        %v2632 = vmul.f32 %v2631, %v2595
        %v2633 = vand.u32 2147483647, %v2595
        %vm2634 = vcmp.lt.f32.partialorder %v2633, 0.0004427343
        %v2635 = vsel %vm2634, %v2632, %v2629
        %v2636 = vadd.f32 %v2597, 1.0
        %v2637 = vlog2.pop %v2636
        %v2638 = vmul.f32 %v2637, 0.6931472
        %v2639 = vmul.f32 -0.5, %v2597
        %v2640 = vadd.f32 %v2639, 1.0
        %v2641 = vmul.f32 %v2640, %v2597
        %v2642 = vand.u32 2147483647, %v2597
        %vm2643 = vcmp.lt.f32.partialorder %v2642, 0.0004427343
        %v2644 = vsel %vm2643, %v2641, %v2638
        %v2645 = vadd.f32 %v2599, 1.0
        %v2646 = vlog2.pop %v2645
        %v2647 = vmul.f32 %v2646, 0.6931472
        %v2648 = vmul.f32 -0.5, %v2599
        %v2649 = vadd.f32 %v2648, 1.0
        %v2650 = vmul.f32 %v2649, %v2599
        %v2651 = vand.u32 2147483647, %v2599
        %vm2652 = vcmp.lt.f32.partialorder %v2651, 0.0004427343
        %v2653 = vsel %vm2652, %v2650, %v2647
        %v2654 = vadd.f32 %v2558, %v2608
        %v2655 = vadd.f32 %v2559, %v2617
        %v2656 = vadd.f32 %v2560, %v2626
        %v2657 = vadd.f32 %v2561, %v2635
        %v2658 = vadd.f32 %v2562, %v2644
        %v2659 = vadd.f32 %v2563, %v2653
        %v2660 = vsel %vm2564, %v2570, %v2654
        %v2661 = vsel %vm2565, %v2571, %v2655
        %v2662 = vsel %vm2566, %v2572, %v2656
        %v2663 = vsel %vm2567, %v2573, %v2657
        %v2664 = vsel %vm2568, %v2574, %v2658
        %v2665 = vsel %vm2569, %v2575, %v2659
        %v2666 = vtanh.pop %v2660
        %v2667 = vtanh.pop %v2661
        %v2668 = vtanh.pop %v2662
        %v2669 = vtanh.pop %v2663
        %v2670 = vtanh.pop %v2664
        %v2671 = vtanh.pop %v2665
        %v2672 = vmul.f32 %v2536, %v2666
        %v2673 = vmul.f32 %v2539, %v2667
        %v2674 = vmul.f32 %v2544, %v2668
        %v2675 = vmul.f32 %v2547, %v2669
        %v2676 = vmul.f32 %v2552, %v2670
        %v2677 = vmul.f32 %v2555, %v2671
        %v2678 = vadd.f32 %v2672, %v2673
        %v2679 = vadd.f32 %v2678, %v2674
        %v2680 = vadd.f32 %v2679, %v2675
        %v2681 = vadd.f32 %v2680, %v2676
        %vm2682 = vcmask 1042432
        %v2683 = vsel %vm2682, %v2677, 0.0
        %v2684 = vadd.f32 %v2681, %v2683
        %v2685 = vrot.slane %v2684, 4
        %v2686 = vadd.f32 %v2684, %v2685
        %v2687 = vrot.slane %v2686, 2
        %v2688 = vadd.f32 %v2686, %v2687
        %v2689 = vrot.slane %v2688, 1
        %v2690 = vadd.f32 %v2688, %v2689
        %v2691 = vrcp.pop 43.0
        %v2692 = vmul.f32 %v2690, %v2691
        %v2693 = vpack.c.bf16 %v2692, %v2692
        %v2694 = vld [vmem:[%s7] sm:$0xf]
        %v2695 = vld [vmem:[%s7 + $0x4] sm:$0xf]
        %v2696 = vld [vmem:[%s7 + $0x8] sm:$0xf]
        %v2697 = vld [vmem:[%s7 + $0xc] sm:$0xf]
        %v2698 = vld [vmem:[%s7 + $0x10] sm:$0xf]
        %v2699 = vld [vmem:[%s7 + $0x14] sm:$0xf]
        %v2700 = vld [vmem:[%s7 + $0x18] sm:$0xf]
        %v2701 = vld [vmem:[%s7 + $0x1c] sm:$0xf]
        %v2702 = vld [vmem:[%s7 + $0x20] sm:$0xf]
        %v2703 = vld [vmem:[%s7 + $0x24] sm:$0xf]
        %v2704 = vld [vmem:[%s7 + $0x28] sm:$0xf]
        %v2705 = vld [vmem:[%s7 + $0x2c] sm:$0xf]
        %v2706 = vld [vmem:[%s7 + $0x30] sm:$0xf]
        %v2707 = vld [vmem:[%s7 + $0x34] sm:$0xf]
        %v2708 = vld [vmem:[%s7 + $0x38] sm:$0xf]
        %v2709 = vld [vmem:[%s7 + $0x3c] sm:$0xf]
        %v2710 = vld [vmem:[%s8] sm:$0x1]
        %v2727 = vunpack.c.l.b16 %v2694
        %v2728 = vunpack.c.l.b16 %v2695
        %v2729 = vunpack.c.l.b16 %v2696
        %v2730 = vunpack.c.l.b16 %v2697
        %v2731 = vunpack.c.l.b16 %v2698
        %v2732 = vunpack.c.l.b16 %v2699
        %v2733 = vunpack.c.l.b16 %v2700
        %v2734 = vunpack.c.l.b16 %v2701
        %v2735 = vunpack.c.l.b16 %v2702
        %v2736 = vunpack.c.l.b16 %v2703
        %v2737 = vunpack.c.l.b16 %v2704
        %v2738 = vunpack.c.l.b16 %v2705
        %v2739 = vunpack.c.l.b16 %v2706
        %v2740 = vunpack.c.l.b16 %v2707
        %v2741 = vunpack.c.l.b16 %v2708
        %v2742 = vunpack.c.l.b16 %v2709
        %v2743 = vpack.c.b16 %v2728, %v2727
        %v2744 = vpack.c.b16 %v2730, %v2729
        %v2745 = vpack.c.b16 %v2732, %v2731
        %v2746 = vpack.c.b16 %v2734, %v2733
        %v2747 = vpack.c.b16 %v2736, %v2735
        %v2748 = vpack.c.b16 %v2738, %v2737
        %v2749 = vpack.c.b16 %v2740, %v2739
        %v2750 = vpack.c.b16 %v2742, %v2741
        %2759 = vmatprep.subr.bf16.mxu0 0
        %2760 = vmatpush1.bf16.msra.mxu0 %v2750
        %2761 = vmatprep.subr.bf16.mxu0 0
        %2762 = vmatpush1.bf16.msra.mxu0 %v2749
        %2763 = vmatprep.subr.bf16.mxu0 0
        %2764 = vmatpush1.bf16.msra.mxu0 %v2748
        %2765 = vmatprep.subr.bf16.mxu0 0
        %2766 = vmatpush1.bf16.msra.mxu0 %v2747
        %2767 = vmatprep.subr.bf16.mxu0 0
        %2768 = vmatpush1.bf16.msra.mxu0 %v2746
        %2769 = vmatprep.subr.bf16.mxu0 0
        %2770 = vmatpush1.bf16.msra.mxu0 %v2745
        %2771 = vmatprep.subr.bf16.mxu0 0
        %2772 = vmatpush1.bf16.msra.mxu0 %v2744
        %2773 = vmatprep.subr.bf16.mxu0 0
        %2774 = vmatpush1.bf16.msra.mxu0 %v2743
        %2775 = vmatprep.subr.bf16.mxu0 0
        %2776 = vmatpush2.bf16.msra.mxu0 0
        %2777 = vmatprep.subr.bf16.mxu0 0
        %2778 = vmatpush2.bf16.msra.mxu0 0
        %2779 = vmatprep.subr.bf16.mxu0 0
        %2780 = vmatpush2.bf16.msra.mxu0 0
        %2781 = vmatprep.subr.bf16.mxu0 0
        %2782 = vmatpush2.bf16.msra.mxu0 0
        %2783 = vmatprep.subr.bf16.mxu0 0
        %2784 = vmatpush2.bf16.msra.mxu0 0
        %2785 = vmatprep.subr.bf16.mxu0 0
        %2786 = vmatpush2.bf16.msra.mxu0 0
        %2787 = vmatprep.subr.bf16.mxu0 0
        %2788 = vmatpush2.bf16.msra.mxu0 0
        %2789 = vmatprep.subr.bf16.mxu0 0
        %2790 = vmatpush2.bf16.msra.mxu0 0
        %2791 = vmatprep.mubr.bf16.mxu0 0
        %2792 = vmatmul.mubr.bf16.gmra.mxu0 %v2693
        %v2793 = vpop.f32.mrf.mxu0
        %v2794 = vadd.f32 %v2710, %v2793
        %v2795 = vpop.f32.mrf.mxu0
        %v2796 = vpop.f32.mrf.mxu0
        %v2797 = vpop.f32.mrf.mxu0
        %2798 = vdwg.mxu0
        %v2799 = vmax.f32 %v2794, 0.0
        %vm2800 = vcmp.ne.f32.partialorder %v2794, %v2794
        %v2801 = vadd.f32 %v2794, 0.0
        %v2802 = vand.u32 2147483647, %v2794
        %v2803 = vsub.f32 0.0, %v2802
        %v2804 = vmul.f32 %v2803, 1.442695
        %v2805 = vpow.pop %v2804
        %v2806 = vadd.f32 %v2805, 1.0
        %v2807 = vlog2.pop %v2806
        %v2808 = vmul.f32 %v2807, 0.6931472
        %v2809 = vmul.f32 -0.5, %v2805
        %v2810 = vadd.f32 %v2809, 1.0
        %v2811 = vmul.f32 %v2810, %v2805
        %v2812 = vand.u32 2147483647, %v2805
        %vm2813 = vcmp.lt.f32.partialorder %v2812, 0.0004427343
        %v2814 = vsel %vm2813, %v2811, %v2808
        %v2815 = vadd.f32 %v2799, %v2814
        %v2816 = vsel %vm2800, %v2801, %v2815
        %v2817 = vtanh.pop %v2816
        %v2818 = vmul.f32 %v2794, %v2817
        %v2819 = vmul.f32 %v2818, %v2818
        %vm2820 = vcmask 1040384
        %v2821 = vsel %vm2820, %v2819, 0.0
        %2822 = vadd.xlane.f32.xlu0 %v2821
        %v2823 = vpop.xlane.xlu0 %2822
        %v2824 = vmax.f32 %v2823, 1e-24
        %v2825 = vrsqrt.pop %v2824
        %v2826 = vmul.f32 %v2818, %v2825
        %2827 = vst [vmem:[%s324] sm:$0x1] %v2826
        %s2828 = sand.u32 %s225, 1
        %s2829 = scalar_lea.sflag [#allocation5], %s2828
        %s2830 = sand.u32 %s225, 1
        %s2831 = scalar_lea.vmem [#allocation4], %s2830
        // Predicated region
        $region57: #{simple_sleep_net_forward.1} parent=55 // pred_check
          %p2832 = pneg %p235
        $region58: #{simple_sleep_net_forward.1} parent=55 // pred_check_branch
          %2834 = sbr.rel (%p2832) target = $region60
        $region59: #{simple_sleep_net_forward.1} parent=55 // pred_region
          %s2836 = ssub.s32 16, 16
          %2837 = vsyncadd %s2829, %s2836
          %s2838 = smul.addr %s23, 16
          %s2839 = scalar_lea.hbm %s9, %s2838
          %s2841 = sshll.u32 %s2831, 4
          %s2842 = int_to_ptr.vmem [resolvable:$true] %s2841
          %2844 = dma.vmem_to_hbm [thread:$0]  %s2842, 16, %s2839, %s2829
        $region60: #{simple_sleep_net_forward.1} parent=55 // pred_fallthru
          _
      $region56: #{simple_sleep_net_forward.1} parent=5 // pred_fallthru
        _
      %p2845 = scmp.le.s32.totalorder 2, %s18
      // Predicated region
      $region61: #{simple_sleep_net_forward.1} parent=5 // pred_check
        %p2846 = pneg %p2845
      $region62: #{simple_sleep_net_forward.1} parent=5 // pred_check_branch
        %2848 = sbr.rel (%p2846) target = $region64
      $region63: #{simple_sleep_net_forward.1} parent=5 // pred_region
        %s2849 = ssub.s32 %s18, 2
        // Predicated region
        $region65: #{simple_sleep_net_forward.1} parent=63 // pred_check
          %p2850 = pneg %p241
        $region66: #{simple_sleep_net_forward.1} parent=63 // pred_check_branch
          %2852 = sbr.rel (%p2850) target = $region68
        $region67: #{simple_sleep_net_forward.1} parent=63 // pred_region
          %s2853 = sand.u32 %s226, 1
          %s2854 = scalar_lea.sflag [#allocation5], %s2853
          %s2855 = sand.u32 %s226, 1
          %s2856 = scalar_lea.vmem [#allocation4], %s2855
          %2857 = dma.done %s2854, 16
        $region68: #{simple_sleep_net_forward.1} parent=63 // pred_fallthru
          _
      $region64: #{simple_sleep_net_forward.1} parent=5 // pred_fallthru
        _
    $region6: #{simple_sleep_net_forward.1} parent=1 // loop_footer
      %s22 = sadd.s32 1, %s18
    $region7: #{simple_sleep_net_forward.1} parent=1 // loop_footer_branch
      %17 = sbr.rel target = $region3
    $region8: #{simple_sleep_net_forward.1} parent=1 // loop_exit
      _
    %2858 = vsyncpa [#allocation5], 1
    %s2859 = scalar_lea.sflag [#allocation5], 1
    %2860 = vsyncpa %s2859, 1

</llo_original>
